<compile_context>
chip_gen: v7x
topology: tpu7x:2x2x1
jax: 0.10.0
libtpu: 0.0.40
codegen_flags: <defaults>
</compile_context>

<pallas_src>
import functools

import jax
import jax.numpy as jnp
from jax.experimental import pallas as pl
from jax.experimental.pallas import tpu as pltpu


def gru_pos_kernel(ids_ref, pg_ref, pc_ref, out_ref, hs_ref, *, T, B, Vp, Hg):
    """Single-core kernel: whole (small) sequence + weights resident in VMEM.

    ids_ref : (T*B, 1)  int32 token ids, time-major rows [t0 b0, t0 b1, t1 b0, ...]
    pg_ref  : (Vp+Hg+8, 3*Hg)  packed gate-path params:
                rows [0, Vp)        : emb_table @ [W_ir|W_iz|W_in]^T (gate-lane padded)
                rows [Vp, Vp+Hg)    : [W_hr|W_hz|W_hn]^T            (gate-lane padded)
                row   Vp+Hg         : [b_ir+b_hr | b_iz+b_hz | b_in] (gate-lane padded)
                row   Vp+Hg+1       : [b_hn | 0 ...]
    pc_ref  : (Hg+8, Cpad)  packed classifier params: rows [0,Hg) = W_c^T, row Hg = b_c
    out_ref : (T*B, Cpad)   per-token logits (lane-padded, lane-dense stores)
    hs_ref  : (T*B, Hg) f32 scratch holding every timestep's hidden state
    """
    f32 = jnp.float32

    # --- Packed params: static, 8/128-aligned slices, loaded once. -----------
    w_emb_i = pg_ref[0:Vp, :]                               # (Vp, 3Hg)
    w_h = pg_ref[Vp:Vp + Hg, :]                             # (Hg, 3Hg)
    b_rows = pg_ref[Vp + Hg:Vp + Hg + 2, :]                 # (2, 3Hg)
    b_i = b_rows[0:1, :].astype(f32)                        # (1, 3Hg)
    b_hn = b_rows[1:2, :Hg].astype(f32)                     # (1, Hg)
    dt = w_emb_i.dtype

    # (1) Fused embedding gather + batched input projection for ALL timesteps:
    #     one_hot(ids) @ (emb_table @ W_i) == emb(ids) @ W_i, one MXU matmul.
    ids = ids_ref[...]                                      # (T*B, 1) int32
    vocab_iota = jax.lax.broadcasted_iota(jnp.int32, (T * B, Vp), 1)
    one_hot = jnp.where(vocab_iota == ids, 1.0, 0.0).astype(dt)       # (T*B, Vp)
    gi = jnp.dot(one_hot, w_emb_i,
                 preferred_element_type=f32) + b_i          # (T*B, 3Hg) f32

    # Hoisted out of the serial loop: JAX does not CSE broadcast_in_dim, so a
    # per-step broadcast would land on the serial critical path T times.
    b_hn_b = jnp.broadcast_to(b_hn, (B, Hg))

    # (2) Serial recurrence: one fused (B,Hg)@(Hg,3Hg) dot per step. Gates are
    #     padded to 128-lane groups, so every slice below is a tile-aligned
    #     register view (padded lanes of h stay exactly 0).
    #     T is small & static -> full static unroll for scheduler visibility.
    # TODO(synk): w_h could be held weight-stationary in the MXU across the
    # recurrence (pltpu.matmul_push_rhs / matmul_acc_lhs / matmul_pop) to avoid
    # re-streaming the RHS every step; kept on the portable jnp.dot path here.
    h = jnp.zeros((B, Hg), f32)
    for t in range(T):
        gi_t = gi[t * B:(t + 1) * B]                        # (B, 3Hg) static slice
        gh = jnp.dot(h.astype(dt), w_h,
                     preferred_element_type=f32)            # (B, 3Hg) f32
        r = jax.nn.sigmoid(gi_t[:, :Hg] + gh[:, :Hg])
        z = jax.nn.sigmoid(gi_t[:, Hg:2 * Hg] + gh[:, Hg:2 * Hg])
        n = jnp.tanh(gi_t[:, 2 * Hg:] + r * (gh[:, 2 * Hg:] + b_hn_b))
        h = (1.0 - z) * n + z * h
        hs_ref[t * B:(t + 1) * B, :] = h                    # overlaps next step's MXU work

    # (3) Classifier hoisted out of the loop: one matmul + one lane-dense store.
    # TODO(synk): torch.dropout(gru_out, 0.1, self.training) is implemented as
    # identity (eval-mode semantics); stochastic training-mode dropout is not
    # reproduced here.
    w_c = pc_ref[0:Hg, :]                                   # (Hg, Cpad)
    b_c = pc_ref[Hg:Hg + 1, :].astype(f32)                  # (1, Cpad)
    logits = jnp.dot(hs_ref[...].astype(dt), w_c,
                     preferred_element_type=f32) + b_c      # (T*B, Cpad)
    out_ref[...] = logits.astype(out_ref.dtype)


def _round_up(n, m):
    return ((n + m - 1) // m) * m


def prepare_params(params, operand_dtype=jnp.bfloat16):
    """One-time weight prep: fuse emb@W_i, fold r/z biases, pad gates to 128-lane
    groups, lane-pad the classifier, and pack everything into two VMEM operands.

    Default operand_dtype=bf16 (recommended on v5e/v6e/v7x: single-pass MXU on
    the serial per-step dot); accumulation and gate/state math stay f32.
    """
    emb_table, w_ih, w_hh, b_ih, b_hh, w_cls, b_cls = params
    V, E = emb_table.shape
    H = w_hh.shape[1]
    C = w_cls.shape[0]
    Hg = _round_up(H, 128)        # per-gate lane group -> tile-aligned gate slices
    G = 3 * Hg
    Cp = _round_up(C, 128)        # lane-dense classifier output
    Vp = _round_up(V, 8)          # sublane-aligned row offsets in the packed buffer
    f32 = jnp.float32
    hi = jax.lax.Precision.HIGHEST

    # PyTorch GRU packs gates as [r | z | n] along dim 0 of weight_ih / weight_hh.
    # Fuse the embedding table with the input projection (exact for one-hot
    # selection):  one_hot @ (emb_table @ W_i^T) == emb(ids) @ W_i^T.
    # TODO(synk): for a production-size vocab, keep emb_table separate and
    # stream it instead of materializing (V, 3Hg).
    w_emb_i = jnp.dot(emb_table.astype(f32), w_ih.T.astype(f32), precision=hi)  # (V, 3H)

    def pad_gates(m, rows_to):
        # (R, 3H) -> (rows_to, 3Hg) with gate g living in lanes [g*Hg, g*Hg+H).
        R = m.shape[0]
        out = jnp.zeros((rows_to, G), f32)
        for g in range(3):
            out = out.at[:R, g * Hg:g * Hg + H].set(m[:, g * H:(g + 1) * H])
        return out

    w_emb_i_p = pad_gates(w_emb_i, Vp)                         # (Vp, 3Hg)
    w_h_p = pad_gates(w_hh.T.astype(f32), Hg)                  # (Hg, 3Hg)

    # Fold b_ih + b_hh for the r and z gates; keep b_in on the input side and
    # b_hn separate (it is multiplied by r inside the n gate — PyTorch semantics).
    b_i = jnp.concatenate([b_ih[:2 * H] + b_hh[:2 * H], b_ih[2 * H:]]).astype(f32)
    b_i_p = pad_gates(b_i.reshape(1, 3 * H), 1)                # (1, 3Hg)
    b_hn_p = jnp.zeros((1, G), f32).at[0, :H].set(b_hh[2 * H:].astype(f32))

    bias_block = jnp.zeros((8, G), f32).at[0:1].set(b_i_p).at[1:2].set(b_hn_p)

    # Two packed operands -> 3 input DMAs per forward instead of 7.
    pack_g = jnp.concatenate([w_emb_i_p, w_h_p, bias_block],
                             axis=0).astype(operand_dtype)     # (Vp+Hg+8, 3Hg)

    w_c_p = jnp.zeros((Hg, Cp), f32).at[:H, :C].set(w_cls.T.astype(f32))
    b_c_p = jnp.zeros((8, Cp), f32).at[0, :C].set(b_cls.astype(f32))
    pack_c = jnp.concatenate([w_c_p, b_c_p], axis=0).astype(operand_dtype)  # (Hg+8, Cp)

    return dict(pack_g=pack_g, pack_c=pack_c, V=V, Vp=Vp, H=H, Hg=Hg, C=C, Cp=Cp,
                operand_dtype=operand_dtype)


def pos_predictor_v2_forward(x, prepped):
    """x: (B, T) int32 token ids -> (B, T, n_classes) float32 logits."""
    B, T = x.shape
    C, Cp, Hg, Vp = prepped["C"], prepped["Cp"], prepped["Hg"], prepped["Vp"]

    # Only remaining wrapper-side glue on the input path: a 64-byte id relayout
    # to time-major. The embedding gather itself runs inside the kernel.
    ids_tm = jnp.transpose(x.astype(jnp.int32), (1, 0)).reshape(T * B, 1)

    kernel = functools.partial(gru_pos_kernel, T=T, B=B, Vp=Vp, Hg=Hg)
    vmem = pl.BlockSpec(memory_space=pltpu.MemorySpace.VMEM)
    # TODO(synk): at production B/T, add a grid: batch axis "parallel" (v7x's
    # 2 TensorCores) + time axis "arbitrary" with BlockSpec streaming; budget
    # tiles against v7x's 64 MiB VMEM (half a v6e tuning) and set
    # pltpu.CompilerParams(vmem_limit_bytes=...). Unnecessary at toy shapes.
    out2d = pl.pallas_call(
        kernel,
        out_shape=jax.ShapeDtypeStruct((T * B, Cp), jnp.float32),
        in_specs=[vmem, vmem, vmem],
        out_specs=vmem,
        scratch_shapes=[pltpu.VMEM((T * B, Hg), jnp.float32)],
    )(ids_tm, prepped["pack_g"], prepped["pack_c"])

    # Un-pad lanes and restore PyTorch's batch_first layout (single fused XLA copy).
    return jnp.transpose(out2d[:, :C].reshape(T, B, C), (1, 0, 2))  # (B, T, C)


def pos_predictor_v2_reference(x, params):
    """Pure-JAX reference mirroring the PyTorch module (eval-mode dropout)."""
    emb_table, w_ih, w_hh, b_ih, b_hh, w_cls, b_cls = params
    B, T = x.shape
    H = w_hh.shape[1]
    emb_x = jnp.take(emb_table, x, axis=0)                         # (B, T, E)

    def cell(h, x_t):
        gi = x_t @ w_ih.T + b_ih
        gh = h @ w_hh.T + b_hh
        i_r, i_z, i_n = gi[:, :H], gi[:, H:2 * H], gi[:, 2 * H:]
        h_r, h_z, h_n = gh[:, :H], gh[:, H:2 * H], gh[:, 2 * H:]
        r = jax.nn.sigmoid(i_r + h_r)
        z = jax.nn.sigmoid(i_z + h_z)
        n = jnp.tanh(i_n + r * h_n)
        h_new = (1.0 - z) * n + z * h
        return h_new, h_new

    h0 = jnp.zeros((B, H), jnp.float32)
    _, hs = jax.lax.scan(cell, h0, jnp.transpose(emb_x, (1, 0, 2)))  # (T, B, H)
    gru_out = jnp.transpose(hs, (1, 0, 2))                           # (B, T, H)
    return gru_out @ w_cls.T + b_cls                                 # (B, T, C)


def init_params(key, vocab_size, emb_dim, hidden_dim, n_classes):
    """Deterministic, PyTorch-shaped parameters (synthetic, no checkpoint)."""
    ks = jax.random.split(key, 7)
    s = 1.0 / jnp.sqrt(hidden_dim)
    emb_table = jax.random.normal(ks[0], (vocab_size, emb_dim), jnp.float32)
    w_ih = jax.random.uniform(ks[1], (3 * hidden_dim, emb_dim), jnp.float32, -s, s)
    w_hh = jax.random.uniform(ks[2], (3 * hidden_dim, hidden_dim), jnp.float32, -s, s)
    b_ih = jax.random.uniform(ks[3], (3 * hidden_dim,), jnp.float32, -s, s)
    b_hh = jax.random.uniform(ks[4], (3 * hidden_dim,), jnp.float32, -s, s)
    w_cls = jax.random.uniform(ks[5], (n_classes, hidden_dim), jnp.float32, -s, s)
    b_cls = jax.random.uniform(ks[6], (n_classes,), jnp.float32, -s, s)
    return (emb_table, w_ih, w_hh, b_ih, b_hh, w_cls, b_cls)


if __name__ == "__main__":
    # Small shapes consistent with the module's forward: tokens (B, T) -> logits (B, T, C).
    B, T = 2, 8
    vocab_size, emb_dim, hidden_dim, n_classes = 50, 32, 32, 12

    key = jax.random.PRNGKey(0)
    k_par, k_tok = jax.random.split(key)
    params = init_params(k_par, vocab_size, emb_dim, hidden_dim, n_classes)
    x = jax.random.randint(k_tok, (B, T), 0, vocab_size, dtype=jnp.int32)

    ref = jax.block_until_ready(pos_predictor_v2_reference(x, params))

    # f32-MXU-operand path: tight check vs the pure-JAX reference.
    prepped_f32 = prepare_params(params, operand_dtype=jnp.float32)
    out_f32 = jax.block_until_ready(pos_predictor_v2_forward(x, prepped_f32))
    assert out_f32.shape == (B, T, n_classes)
    assert jnp.allclose(out_f32, ref, rtol=1e-5, atol=1e-5), "f32 path mismatch vs reference"

    # Default bf16-MXU-operand path (v5e/v6e/v7x recommendation): f32 accumulation
    # and f32 gate/state math; validated at a looser tolerance.
    prepped_bf16 = prepare_params(params)  # operand_dtype defaults to bf16
    out_bf16 = jax.block_until_ready(pos_predictor_v2_forward(x, prepped_bf16))
    assert out_bf16.shape == (B, T, n_classes)
    assert bool(jnp.all(jnp.isfinite(out_bf16)))
    assert jnp.allclose(out_bf16, ref, rtol=3e-2, atol=3e-2), "bf16 path mismatch vs reference"

    print("KERNEL_OK")
</pallas_src>

<mosaic_0001>
module attributes {stable_mosaic.version = 11 : i64} {
  func.func @gru_pos_kernel(%arg0: memref<16x1xi32, #tpu.memory_space<vmem>>, %arg1: memref<192x384xf32, #tpu.memory_space<vmem>>, %arg2: memref<136x128xf32, #tpu.memory_space<vmem>>, %arg3: memref<16x128xf32, #tpu.memory_space<vmem>>, %arg4: memref<16x128xf32, #tpu.memory_space<vmem>>) attributes {dimension_semantics = [], scalar_prefetch = 0 : i64, scratch_operands = 1 : i64, tpu.core_type = #tpu.core_type<tc>} {
    %c0 = arith.constant 0 : index
    %c0_0 = arith.constant 0 : index
    %0 = vector.load %arg1[%c0, %c0_0] : memref<192x384xf32, #tpu.memory_space<vmem>>, vector<56x384xf32>
    %c56 = arith.constant 56 : index
    %c0_1 = arith.constant 0 : index
    %1 = vector.load %arg1[%c56, %c0_1] : memref<192x384xf32, #tpu.memory_space<vmem>>, vector<128x384xf32>
    %c184 = arith.constant 184 : index
    %c0_2 = arith.constant 0 : index
    %2 = vector.load %arg1[%c184, %c0_2] : memref<192x384xf32, #tpu.memory_space<vmem>>, vector<2x384xf32>
    %3 = vector.extract_strided_slice %2 {offsets = [0, 0], sizes = [1, 384], strides = [1, 1]} : vector<2x384xf32> to vector<1x384xf32>
    %4 = vector.extract_strided_slice %2 {offsets = [1, 0], sizes = [1, 128], strides = [1, 1]} : vector<2x384xf32> to vector<1x128xf32>
    %c0_3 = arith.constant 0 : index
    %c0_4 = arith.constant 0 : index
    %5 = vector.load %arg0[%c0_3, %c0_4] : memref<16x1xi32, #tpu.memory_space<vmem>>, vector<16x1xi32>
    %6 = tpu.iota {dimensions = array<i32: 1>} : vector<16x56xi32>
    %7 = vector.broadcast %5 : vector<16x1xi32> to vector<16x56xi32>
    %8 = arith.cmpi eq, %6, %7 : vector<16x56xi32>
    %cst = arith.constant 1.000000e+00 : f32
    %cst_5 = arith.constant 0.000000e+00 : f32
    %9 = vector.broadcast %cst : f32 to vector<16x56xf32>
    %10 = vector.broadcast %cst_5 : f32 to vector<16x56xf32>
    %11 = arith.select %8, %9, %10 : vector<16x56xi1>, vector<16x56xf32>
    %cst_6 = arith.constant dense<0.000000e+00> : vector<16x384xf32>
    %12 = tpu.matmul %11, %0, %cst_6 {dimension_numbers = #tpu.dot_dimension_numbers<[1], [0], [0], [1], [0, 0, 1, 1], [], []>} : vector<16x56xf32>, vector<56x384xf32>, vector<16x384xf32> -> vector<16x384xf32>
    %13 = vector.broadcast %3 : vector<1x384xf32> to vector<16x384xf32>
    %14 = arith.addf %12, %13 : vector<16x384xf32>
    %15 = vector.shape_cast %4 : vector<1x128xf32> to vector<1x128xf32>
    %16 = vector.broadcast %15 : vector<1x128xf32> to vector<2x128xf32>
    %cst_7 = arith.constant 0.000000e+00 : f32
    %17 = vector.broadcast %cst_7 : f32 to vector<2x128xf32>
    %18 = vector.extract_strided_slice %14 {offsets = [0, 0], sizes = [2, 384], strides = [1, 1]} : vector<16x384xf32> to vector<2x384xf32>
    %cst_8 = arith.constant dense<0.000000e+00> : vector<2x384xf32>
    %19 = tpu.matmul %17, %1, %cst_8 {dimension_numbers = #tpu.dot_dimension_numbers<[1], [0], [0], [1], [0, 0, 1, 1], [], []>} : vector<2x128xf32>, vector<128x384xf32>, vector<2x384xf32> -> vector<2x384xf32>
    %20 = vector.extract_strided_slice %18 {offsets = [0, 0], sizes = [2, 128], strides = [1, 1]} : vector<2x384xf32> to vector<2x128xf32>
    %21 = vector.extract_strided_slice %19 {offsets = [0, 0], sizes = [2, 128], strides = [1, 1]} : vector<2x384xf32> to vector<2x128xf32>
    %22 = arith.addf %20, %21 : vector<2x128xf32>
    %23 = arith.negf %22 : vector<2x128xf32>
    %24 = math.exp %23 : vector<2x128xf32>
    %cst_9 = arith.constant 1.000000e+00 : f32
    %25 = vector.broadcast %cst_9 : f32 to vector<2x128xf32>
    %26 = arith.addf %25, %24 : vector<2x128xf32>
    %27 = arith.divf %25, %26 : vector<2x128xf32>
    %28 = vector.extract_strided_slice %18 {offsets = [0, 128], sizes = [2, 128], strides = [1, 1]} : vector<2x384xf32> to vector<2x128xf32>
    %29 = vector.extract_strided_slice %19 {offsets = [0, 128], sizes = [2, 128], strides = [1, 1]} : vector<2x384xf32> to vector<2x128xf32>
    %30 = arith.addf %28, %29 : vector<2x128xf32>
    %31 = arith.negf %30 : vector<2x128xf32>
    %32 = math.exp %31 : vector<2x128xf32>
    %cst_10 = arith.constant 1.000000e+00 : f32
    %33 = vector.broadcast %cst_10 : f32 to vector<2x128xf32>
    %34 = arith.addf %33, %32 : vector<2x128xf32>
    %35 = arith.divf %33, %34 : vector<2x128xf32>
    %36 = vector.extract_strided_slice %18 {offsets = [0, 256], sizes = [2, 128], strides = [1, 1]} : vector<2x384xf32> to vector<2x128xf32>
    %37 = vector.extract_strided_slice %19 {offsets = [0, 256], sizes = [2, 128], strides = [1, 1]} : vector<2x384xf32> to vector<2x128xf32>
    %38 = arith.addf %37, %16 : vector<2x128xf32>
    %39 = arith.mulf %27, %38 : vector<2x128xf32>
    %40 = arith.addf %36, %39 : vector<2x128xf32>
    %41 = math.tanh %40 : vector<2x128xf32>
    %cst_11 = arith.constant 1.000000e+00 : f32
    %42 = vector.broadcast %cst_11 : f32 to vector<2x128xf32>
    %43 = arith.subf %42, %35 : vector<2x128xf32>
    %44 = arith.mulf %43, %41 : vector<2x128xf32>
    %45 = arith.mulf %35, %17 : vector<2x128xf32>
    %46 = arith.addf %44, %45 : vector<2x128xf32>
    %c0_12 = arith.constant 0 : index
    %c0_13 = arith.constant 0 : index
    %47 = vector.load %arg4[%c0_12, %c0_13] : memref<16x128xf32, #tpu.memory_space<vmem>>, vector<2x128xf32>
    tpu.vector_store %arg4[%c0_12, %c0_13], %46 {strides = array<i32>} : memref<16x128xf32, #tpu.memory_space<vmem>>, vector<2x128xf32>,
    %48 = vector.extract_strided_slice %14 {offsets = [2, 0], sizes = [2, 384], strides = [1, 1]} : vector<16x384xf32> to vector<2x384xf32>
    %cst_14 = arith.constant dense<0.000000e+00> : vector<2x384xf32>
    %49 = tpu.matmul %46, %1, %cst_14 {dimension_numbers = #tpu.dot_dimension_numbers<[1], [0], [0], [1], [0, 0, 1, 1], [], []>} : vector<2x128xf32>, vector<128x384xf32>, vector<2x384xf32> -> vector<2x384xf32>
    %50 = vector.extract_strided_slice %48 {offsets = [0, 0], sizes = [2, 128], strides = [1, 1]} : vector<2x384xf32> to vector<2x128xf32>
    %51 = vector.extract_strided_slice %49 {offsets = [0, 0], sizes = [2, 128], strides = [1, 1]} : vector<2x384xf32> to vector<2x128xf32>
    %52 = arith.addf %50, %51 : vector<2x128xf32>
    %53 = arith.negf %52 : vector<2x128xf32>
    %54 = math.exp %53 : vector<2x128xf32>
    %cst_15 = arith.constant 1.000000e+00 : f32
    %55 = vector.broadcast %cst_15 : f32 to vector<2x128xf32>
    %56 = arith.addf %55, %54 : vector<2x128xf32>
    %57 = arith.divf %55, %56 : vector<2x128xf32>
    %58 = vector.extract_strided_slice %48 {offsets = [0, 128], sizes = [2, 128], strides = [1, 1]} : vector<2x384xf32> to vector<2x128xf32>
    %59 = vector.extract_strided_slice %49 {offsets = [0, 128], sizes = [2, 128], strides = [1, 1]} : vector<2x384xf32> to vector<2x128xf32>
    %60 = arith.addf %58, %59 : vector<2x128xf32>
    %61 = arith.negf %60 : vector<2x128xf32>
    %62 = math.exp %61 : vector<2x128xf32>
    %cst_16 = arith.constant 1.000000e+00 : f32
    %63 = vector.broadcast %cst_16 : f32 to vector<2x128xf32>
    %64 = arith.addf %63, %62 : vector<2x128xf32>
    %65 = arith.divf %63, %64 : vector<2x128xf32>
    %66 = vector.extract_strided_slice %48 {offsets = [0, 256], sizes = [2, 128], strides = [1, 1]} : vector<2x384xf32> to vector<2x128xf32>
    %67 = vector.extract_strided_slice %49 {offsets = [0, 256], sizes = [2, 128], strides = [1, 1]} : vector<2x384xf32> to vector<2x128xf32>
    %68 = arith.addf %67, %16 : vector<2x128xf32>
    %69 = arith.mulf %57, %68 : vector<2x128xf32>
    %70 = arith.addf %66, %69 : vector<2x128xf32>
    %71 = math.tanh %70 : vector<2x128xf32>
    %cst_17 = arith.constant 1.000000e+00 : f32
    %72 = vector.broadcast %cst_17 : f32 to vector<2x128xf32>
    %73 = arith.subf %72, %65 : vector<2x128xf32>
    %74 = arith.mulf %73, %71 : vector<2x128xf32>
    %75 = arith.mulf %65, %46 : vector<2x128xf32>
    %76 = arith.addf %74, %75 : vector<2x128xf32>
    %c2 = arith.constant 2 : index
    %c0_18 = arith.constant 0 : index
    %77 = vector.load %arg4[%c2, %c0_18] : memref<16x128xf32, #tpu.memory_space<vmem>>, vector<2x128xf32>
    tpu.vector_store %arg4[%c2, %c0_18], %76 {strides = array<i32>} : memref<16x128xf32, #tpu.memory_space<vmem>>, vector<2x128xf32>,
    %78 = vector.extract_strided_slice %14 {offsets = [4, 0], sizes = [2, 384], strides = [1, 1]} : vector<16x384xf32> to vector<2x384xf32>
    %cst_19 = arith.constant dense<0.000000e+00> : vector<2x384xf32>
    %79 = tpu.matmul %76, %1, %cst_19 {dimension_numbers = #tpu.dot_dimension_numbers<[1], [0], [0], [1], [0, 0, 1, 1], [], []>} : vector<2x128xf32>, vector<128x384xf32>, vector<2x384xf32> -> vector<2x384xf32>
    %80 = vector.extract_strided_slice %78 {offsets = [0, 0], sizes = [2, 128], strides = [1, 1]} : vector<2x384xf32> to vector<2x128xf32>
    %81 = vector.extract_strided_slice %79 {offsets = [0, 0], sizes = [2, 128], strides = [1, 1]} : vector<2x384xf32> to vector<2x128xf32>
    %82 = arith.addf %80, %81 : vector<2x128xf32>
    %83 = arith.negf %82 : vector<2x128xf32>
    %84 = math.exp %83 : vector<2x128xf32>
    %cst_20 = arith.constant 1.000000e+00 : f32
    %85 = vector.broadcast %cst_20 : f32 to vector<2x128xf32>
    %86 = arith.addf %85, %84 : vector<2x128xf32>
    %87 = arith.divf %85, %86 : vector<2x128xf32>
    %88 = vector.extract_strided_slice %78 {offsets = [0, 128], sizes = [2, 128], strides = [1, 1]} : vector<2x384xf32> to vector<2x128xf32>
    %89 = vector.extract_strided_slice %79 {offsets = [0, 128], sizes = [2, 128], strides = [1, 1]} : vector<2x384xf32> to vector<2x128xf32>
    %90 = arith.addf %88, %89 : vector<2x128xf32>
    %91 = arith.negf %90 : vector<2x128xf32>
    %92 = math.exp %91 : vector<2x128xf32>
    %cst_21 = arith.constant 1.000000e+00 : f32
    %93 = vector.broadcast %cst_21 : f32 to vector<2x128xf32>
    %94 = arith.addf %93, %92 : vector<2x128xf32>
    %95 = arith.divf %93, %94 : vector<2x128xf32>
    %96 = vector.extract_strided_slice %78 {offsets = [0, 256], sizes = [2, 128], strides = [1, 1]} : vector<2x384xf32> to vector<2x128xf32>
    %97 = vector.extract_strided_slice %79 {offsets = [0, 256], sizes = [2, 128], strides = [1, 1]} : vector<2x384xf32> to vector<2x128xf32>
    %98 = arith.addf %97, %16 : vector<2x128xf32>
    %99 = arith.mulf %87, %98 : vector<2x128xf32>
    %100 = arith.addf %96, %99 : vector<2x128xf32>
    %101 = math.tanh %100 : vector<2x128xf32>
    %cst_22 = arith.constant 1.000000e+00 : f32
    %102 = vector.broadcast %cst_22 : f32 to vector<2x128xf32>
    %103 = arith.subf %102, %95 : vector<2x128xf32>
    %104 = arith.mulf %103, %101 : vector<2x128xf32>
    %105 = arith.mulf %95, %76 : vector<2x128xf32>
    %106 = arith.addf %104, %105 : vector<2x128xf32>
    %c4 = arith.constant 4 : index
    %c0_23 = arith.constant 0 : index
    %107 = vector.load %arg4[%c4, %c0_23] : memref<16x128xf32, #tpu.memory_space<vmem>>, vector<2x128xf32>
    tpu.vector_store %arg4[%c4, %c0_23], %106 {strides = array<i32>} : memref<16x128xf32, #tpu.memory_space<vmem>>, vector<2x128xf32>,
    %108 = vector.extract_strided_slice %14 {offsets = [6, 0], sizes = [2, 384], strides = [1, 1]} : vector<16x384xf32> to vector<2x384xf32>
    %cst_24 = arith.constant dense<0.000000e+00> : vector<2x384xf32>
    %109 = tpu.matmul %106, %1, %cst_24 {dimension_numbers = #tpu.dot_dimension_numbers<[1], [0], [0], [1], [0, 0, 1, 1], [], []>} : vector<2x128xf32>, vector<128x384xf32>, vector<2x384xf32> -> vector<2x384xf32>
    %110 = vector.extract_strided_slice %108 {offsets = [0, 0], sizes = [2, 128], strides = [1, 1]} : vector<2x384xf32> to vector<2x128xf32>
    %111 = vector.extract_strided_slice %109 {offsets = [0, 0], sizes = [2, 128], strides = [1, 1]} : vector<2x384xf32> to vector<2x128xf32>
    %112 = arith.addf %110, %111 : vector<2x128xf32>
    %113 = arith.negf %112 : vector<2x128xf32>
    %114 = math.exp %113 : vector<2x128xf32>
    %cst_25 = arith.constant 1.000000e+00 : f32
    %115 = vector.broadcast %cst_25 : f32 to vector<2x128xf32>
    %116 = arith.addf %115, %114 : vector<2x128xf32>
    %117 = arith.divf %115, %116 : vector<2x128xf32>
    %118 = vector.extract_strided_slice %108 {offsets = [0, 128], sizes = [2, 128], strides = [1, 1]} : vector<2x384xf32> to vector<2x128xf32>
    %119 = vector.extract_strided_slice %109 {offsets = [0, 128], sizes = [2, 128], strides = [1, 1]} : vector<2x384xf32> to vector<2x128xf32>
    %120 = arith.addf %118, %119 : vector<2x128xf32>
    %121 = arith.negf %120 : vector<2x128xf32>
    %122 = math.exp %121 : vector<2x128xf32>
    %cst_26 = arith.constant 1.000000e+00 : f32
    %123 = vector.broadcast %cst_26 : f32 to vector<2x128xf32>
    %124 = arith.addf %123, %122 : vector<2x128xf32>
    %125 = arith.divf %123, %124 : vector<2x128xf32>
    %126 = vector.extract_strided_slice %108 {offsets = [0, 256], sizes = [2, 128], strides = [1, 1]} : vector<2x384xf32> to vector<2x128xf32>
    %127 = vector.extract_strided_slice %109 {offsets = [0, 256], sizes = [2, 128], strides = [1, 1]} : vector<2x384xf32> to vector<2x128xf32>
    %128 = arith.addf %127, %16 : vector<2x128xf32>
    %129 = arith.mulf %117, %128 : vector<2x128xf32>
    %130 = arith.addf %126, %129 : vector<2x128xf32>
    %131 = math.tanh %130 : vector<2x128xf32>
    %cst_27 = arith.constant 1.000000e+00 : f32
    %132 = vector.broadcast %cst_27 : f32 to vector<2x128xf32>
    %133 = arith.subf %132, %125 : vector<2x128xf32>
    %134 = arith.mulf %133, %131 : vector<2x128xf32>
    %135 = arith.mulf %125, %106 : vector<2x128xf32>
    %136 = arith.addf %134, %135 : vector<2x128xf32>
    %c6 = arith.constant 6 : index
    %c0_28 = arith.constant 0 : index
    %137 = vector.load %arg4[%c6, %c0_28] : memref<16x128xf32, #tpu.memory_space<vmem>>, vector<2x128xf32>
    tpu.vector_store %arg4[%c6, %c0_28], %136 {strides = array<i32>} : memref<16x128xf32, #tpu.memory_space<vmem>>, vector<2x128xf32>,
    %138 = vector.extract_strided_slice %14 {offsets = [8, 0], sizes = [2, 384], strides = [1, 1]} : vector<16x384xf32> to vector<2x384xf32>
    %cst_29 = arith.constant dense<0.000000e+00> : vector<2x384xf32>
    %139 = tpu.matmul %136, %1, %cst_29 {dimension_numbers = #tpu.dot_dimension_numbers<[1], [0], [0], [1], [0, 0, 1, 1], [], []>} : vector<2x128xf32>, vector<128x384xf32>, vector<2x384xf32> -> vector<2x384xf32>
    %140 = vector.extract_strided_slice %138 {offsets = [0, 0], sizes = [2, 128], strides = [1, 1]} : vector<2x384xf32> to vector<2x128xf32>
    %141 = vector.extract_strided_slice %139 {offsets = [0, 0], sizes = [2, 128], strides = [1, 1]} : vector<2x384xf32> to vector<2x128xf32>
    %142 = arith.addf %140, %141 : vector<2x128xf32>
    %143 = arith.negf %142 : vector<2x128xf32>
    %144 = math.exp %143 : vector<2x128xf32>
    %cst_30 = arith.constant 1.000000e+00 : f32
    %145 = vector.broadcast %cst_30 : f32 to vector<2x128xf32>
    %146 = arith.addf %145, %144 : vector<2x128xf32>
    %147 = arith.divf %145, %146 : vector<2x128xf32>
    %148 = vector.extract_strided_slice %138 {offsets = [0, 128], sizes = [2, 128], strides = [1, 1]} : vector<2x384xf32> to vector<2x128xf32>
    %149 = vector.extract_strided_slice %139 {offsets = [0, 128], sizes = [2, 128], strides = [1, 1]} : vector<2x384xf32> to vector<2x128xf32>
    %150 = arith.addf %148, %149 : vector<2x128xf32>
    %151 = arith.negf %150 : vector<2x128xf32>
    %152 = math.exp %151 : vector<2x128xf32>
    %cst_31 = arith.constant 1.000000e+00 : f32
    %153 = vector.broadcast %cst_31 : f32 to vector<2x128xf32>
    %154 = arith.addf %153, %152 : vector<2x128xf32>
    %155 = arith.divf %153, %154 : vector<2x128xf32>
    %156 = vector.extract_strided_slice %138 {offsets = [0, 256], sizes = [2, 128], strides = [1, 1]} : vector<2x384xf32> to vector<2x128xf32>
    %157 = vector.extract_strided_slice %139 {offsets = [0, 256], sizes = [2, 128], strides = [1, 1]} : vector<2x384xf32> to vector<2x128xf32>
    %158 = arith.addf %157, %16 : vector<2x128xf32>
    %159 = arith.mulf %147, %158 : vector<2x128xf32>
    %160 = arith.addf %156, %159 : vector<2x128xf32>
    %161 = math.tanh %160 : vector<2x128xf32>
    %cst_32 = arith.constant 1.000000e+00 : f32
    %162 = vector.broadcast %cst_32 : f32 to vector<2x128xf32>
    %163 = arith.subf %162, %155 : vector<2x128xf32>
    %164 = arith.mulf %163, %161 : vector<2x128xf32>
    %165 = arith.mulf %155, %136 : vector<2x128xf32>
    %166 = arith.addf %164, %165 : vector<2x128xf32>
    %c8 = arith.constant 8 : index
    %c0_33 = arith.constant 0 : index
    %167 = vector.load %arg4[%c8, %c0_33] : memref<16x128xf32, #tpu.memory_space<vmem>>, vector<2x128xf32>
    tpu.vector_store %arg4[%c8, %c0_33], %166 {strides = array<i32>} : memref<16x128xf32, #tpu.memory_space<vmem>>, vector<2x128xf32>,
    %168 = vector.extract_strided_slice %14 {offsets = [10, 0], sizes = [2, 384], strides = [1, 1]} : vector<16x384xf32> to vector<2x384xf32>
    %cst_34 = arith.constant dense<0.000000e+00> : vector<2x384xf32>
    %169 = tpu.matmul %166, %1, %cst_34 {dimension_numbers = #tpu.dot_dimension_numbers<[1], [0], [0], [1], [0, 0, 1, 1], [], []>} : vector<2x128xf32>, vector<128x384xf32>, vector<2x384xf32> -> vector<2x384xf32>
    %170 = vector.extract_strided_slice %168 {offsets = [0, 0], sizes = [2, 128], strides = [1, 1]} : vector<2x384xf32> to vector<2x128xf32>
    %171 = vector.extract_strided_slice %169 {offsets = [0, 0], sizes = [2, 128], strides = [1, 1]} : vector<2x384xf32> to vector<2x128xf32>
    %172 = arith.addf %170, %171 : vector<2x128xf32>
    %173 = arith.negf %172 : vector<2x128xf32>
    %174 = math.exp %173 : vector<2x128xf32>
    %cst_35 = arith.constant 1.000000e+00 : f32
    %175 = vector.broadcast %cst_35 : f32 to vector<2x128xf32>
    %176 = arith.addf %175, %174 : vector<2x128xf32>
    %177 = arith.divf %175, %176 : vector<2x128xf32>
    %178 = vector.extract_strided_slice %168 {offsets = [0, 128], sizes = [2, 128], strides = [1, 1]} : vector<2x384xf32> to vector<2x128xf32>
    %179 = vector.extract_strided_slice %169 {offsets = [0, 128], sizes = [2, 128], strides = [1, 1]} : vector<2x384xf32> to vector<2x128xf32>
    %180 = arith.addf %178, %179 : vector<2x128xf32>
    %181 = arith.negf %180 : vector<2x128xf32>
    %182 = math.exp %181 : vector<2x128xf32>
    %cst_36 = arith.constant 1.000000e+00 : f32
    %183 = vector.broadcast %cst_36 : f32 to vector<2x128xf32>
    %184 = arith.addf %183, %182 : vector<2x128xf32>
    %185 = arith.divf %183, %184 : vector<2x128xf32>
    %186 = vector.extract_strided_slice %168 {offsets = [0, 256], sizes = [2, 128], strides = [1, 1]} : vector<2x384xf32> to vector<2x128xf32>
    %187 = vector.extract_strided_slice %169 {offsets = [0, 256], sizes = [2, 128], strides = [1, 1]} : vector<2x384xf32> to vector<2x128xf32>
    %188 = arith.addf %187, %16 : vector<2x128xf32>
    %189 = arith.mulf %177, %188 : vector<2x128xf32>
    %190 = arith.addf %186, %189 : vector<2x128xf32>
    %191 = math.tanh %190 : vector<2x128xf32>
    %cst_37 = arith.constant 1.000000e+00 : f32
    %192 = vector.broadcast %cst_37 : f32 to vector<2x128xf32>
    %193 = arith.subf %192, %185 : vector<2x128xf32>
    %194 = arith.mulf %193, %191 : vector<2x128xf32>
    %195 = arith.mulf %185, %166 : vector<2x128xf32>
    %196 = arith.addf %194, %195 : vector<2x128xf32>
    %c10 = arith.constant 10 : index
    %c0_38 = arith.constant 0 : index
    %197 = vector.load %arg4[%c10, %c0_38] : memref<16x128xf32, #tpu.memory_space<vmem>>, vector<2x128xf32>
    tpu.vector_store %arg4[%c10, %c0_38], %196 {strides = array<i32>} : memref<16x128xf32, #tpu.memory_space<vmem>>, vector<2x128xf32>,
    %198 = vector.extract_strided_slice %14 {offsets = [12, 0], sizes = [2, 384], strides = [1, 1]} : vector<16x384xf32> to vector<2x384xf32>
    %cst_39 = arith.constant dense<0.000000e+00> : vector<2x384xf32>
    %199 = tpu.matmul %196, %1, %cst_39 {dimension_numbers = #tpu.dot_dimension_numbers<[1], [0], [0], [1], [0, 0, 1, 1], [], []>} : vector<2x128xf32>, vector<128x384xf32>, vector<2x384xf32> -> vector<2x384xf32>
    %200 = vector.extract_strided_slice %198 {offsets = [0, 0], sizes = [2, 128], strides = [1, 1]} : vector<2x384xf32> to vector<2x128xf32>
    %201 = vector.extract_strided_slice %199 {offsets = [0, 0], sizes = [2, 128], strides = [1, 1]} : vector<2x384xf32> to vector<2x128xf32>
    %202 = arith.addf %200, %201 : vector<2x128xf32>
    %203 = arith.negf %202 : vector<2x128xf32>
    %204 = math.exp %203 : vector<2x128xf32>
    %cst_40 = arith.constant 1.000000e+00 : f32
    %205 = vector.broadcast %cst_40 : f32 to vector<2x128xf32>
    %206 = arith.addf %205, %204 : vector<2x128xf32>
    %207 = arith.divf %205, %206 : vector<2x128xf32>
    %208 = vector.extract_strided_slice %198 {offsets = [0, 128], sizes = [2, 128], strides = [1, 1]} : vector<2x384xf32> to vector<2x128xf32>
    %209 = vector.extract_strided_slice %199 {offsets = [0, 128], sizes = [2, 128], strides = [1, 1]} : vector<2x384xf32> to vector<2x128xf32>
    %210 = arith.addf %208, %209 : vector<2x128xf32>
    %211 = arith.negf %210 : vector<2x128xf32>
    %212 = math.exp %211 : vector<2x128xf32>
    %cst_41 = arith.constant 1.000000e+00 : f32
    %213 = vector.broadcast %cst_41 : f32 to vector<2x128xf32>
    %214 = arith.addf %213, %212 : vector<2x128xf32>
    %215 = arith.divf %213, %214 : vector<2x128xf32>
    %216 = vector.extract_strided_slice %198 {offsets = [0, 256], sizes = [2, 128], strides = [1, 1]} : vector<2x384xf32> to vector<2x128xf32>
    %217 = vector.extract_strided_slice %199 {offsets = [0, 256], sizes = [2, 128], strides = [1, 1]} : vector<2x384xf32> to vector<2x128xf32>
    %218 = arith.addf %217, %16 : vector<2x128xf32>
    %219 = arith.mulf %207, %218 : vector<2x128xf32>
    %220 = arith.addf %216, %219 : vector<2x128xf32>
    %221 = math.tanh %220 : vector<2x128xf32>
    %cst_42 = arith.constant 1.000000e+00 : f32
    %222 = vector.broadcast %cst_42 : f32 to vector<2x128xf32>
    %223 = arith.subf %222, %215 : vector<2x128xf32>
    %224 = arith.mulf %223, %221 : vector<2x128xf32>
    %225 = arith.mulf %215, %196 : vector<2x128xf32>
    %226 = arith.addf %224, %225 : vector<2x128xf32>
    %c12 = arith.constant 12 : index
    %c0_43 = arith.constant 0 : index
    %227 = vector.load %arg4[%c12, %c0_43] : memref<16x128xf32, #tpu.memory_space<vmem>>, vector<2x128xf32>
    tpu.vector_store %arg4[%c12, %c0_43], %226 {strides = array<i32>} : memref<16x128xf32, #tpu.memory_space<vmem>>, vector<2x128xf32>,
    %228 = vector.extract_strided_slice %14 {offsets = [14, 0], sizes = [2, 384], strides = [1, 1]} : vector<16x384xf32> to vector<2x384xf32>
    %cst_44 = arith.constant dense<0.000000e+00> : vector<2x384xf32>
    %229 = tpu.matmul %226, %1, %cst_44 {dimension_numbers = #tpu.dot_dimension_numbers<[1], [0], [0], [1], [0, 0, 1, 1], [], []>} : vector<2x128xf32>, vector<128x384xf32>, vector<2x384xf32> -> vector<2x384xf32>
    %230 = vector.extract_strided_slice %228 {offsets = [0, 0], sizes = [2, 128], strides = [1, 1]} : vector<2x384xf32> to vector<2x128xf32>
    %231 = vector.extract_strided_slice %229 {offsets = [0, 0], sizes = [2, 128], strides = [1, 1]} : vector<2x384xf32> to vector<2x128xf32>
    %232 = arith.addf %230, %231 : vector<2x128xf32>
    %233 = arith.negf %232 : vector<2x128xf32>
    %234 = math.exp %233 : vector<2x128xf32>
    %cst_45 = arith.constant 1.000000e+00 : f32
    %235 = vector.broadcast %cst_45 : f32 to vector<2x128xf32>
    %236 = arith.addf %235, %234 : vector<2x128xf32>
    %237 = arith.divf %235, %236 : vector<2x128xf32>
    %238 = vector.extract_strided_slice %228 {offsets = [0, 128], sizes = [2, 128], strides = [1, 1]} : vector<2x384xf32> to vector<2x128xf32>
    %239 = vector.extract_strided_slice %229 {offsets = [0, 128], sizes = [2, 128], strides = [1, 1]} : vector<2x384xf32> to vector<2x128xf32>
    %240 = arith.addf %238, %239 : vector<2x128xf32>
    %241 = arith.negf %240 : vector<2x128xf32>
    %242 = math.exp %241 : vector<2x128xf32>
    %cst_46 = arith.constant 1.000000e+00 : f32
    %243 = vector.broadcast %cst_46 : f32 to vector<2x128xf32>
    %244 = arith.addf %243, %242 : vector<2x128xf32>
    %245 = arith.divf %243, %244 : vector<2x128xf32>
    %246 = vector.extract_strided_slice %228 {offsets = [0, 256], sizes = [2, 128], strides = [1, 1]} : vector<2x384xf32> to vector<2x128xf32>
    %247 = vector.extract_strided_slice %229 {offsets = [0, 256], sizes = [2, 128], strides = [1, 1]} : vector<2x384xf32> to vector<2x128xf32>
    %248 = arith.addf %247, %16 : vector<2x128xf32>
    %249 = arith.mulf %237, %248 : vector<2x128xf32>
    %250 = arith.addf %246, %249 : vector<2x128xf32>
    %251 = math.tanh %250 : vector<2x128xf32>
    %cst_47 = arith.constant 1.000000e+00 : f32
    %252 = vector.broadcast %cst_47 : f32 to vector<2x128xf32>
    %253 = arith.subf %252, %245 : vector<2x128xf32>
    %254 = arith.mulf %253, %251 : vector<2x128xf32>
    %255 = arith.mulf %245, %226 : vector<2x128xf32>
    %256 = arith.addf %254, %255 : vector<2x128xf32>
    %c14 = arith.constant 14 : index
    %c0_48 = arith.constant 0 : index
    %257 = vector.load %arg4[%c14, %c0_48] : memref<16x128xf32, #tpu.memory_space<vmem>>, vector<2x128xf32>
    tpu.vector_store %arg4[%c14, %c0_48], %256 {strides = array<i32>} : memref<16x128xf32, #tpu.memory_space<vmem>>, vector<2x128xf32>,
    %c0_49 = arith.constant 0 : index
    %c0_50 = arith.constant 0 : index
    %258 = vector.load %arg2[%c0_49, %c0_50] : memref<136x128xf32, #tpu.memory_space<vmem>>, vector<128x128xf32>
    %c128 = arith.constant 128 : index
    %c0_51 = arith.constant 0 : index
    %259 = vector.load %arg2[%c128, %c0_51] : memref<136x128xf32, #tpu.memory_space<vmem>>, vector<1x128xf32>
    %c0_52 = arith.constant 0 : index
    %c0_53 = arith.constant 0 : index
    %260 = vector.load %arg4[%c0_52, %c0_53] : memref<16x128xf32, #tpu.memory_space<vmem>>, vector<16x128xf32>
    %cst_54 = arith.constant dense<0.000000e+00> : vector<16x128xf32>
    %261 = tpu.matmul %260, %258, %cst_54 {dimension_numbers = #tpu.dot_dimension_numbers<[1], [0], [0], [1], [0, 0, 1, 1], [], []>} : vector<16x128xf32>, vector<128x128xf32>, vector<16x128xf32> -> vector<16x128xf32>
    %262 = vector.broadcast %259 : vector<1x128xf32> to vector<16x128xf32>
    %263 = arith.addf %261, %262 : vector<16x128xf32>
    %c0_55 = arith.constant 0 : index
    %c0_56 = arith.constant 0 : index
    %264 = vector.load %arg3[%c0_55, %c0_56] : memref<16x128xf32, #tpu.memory_space<vmem>>, vector<16x128xf32>
    tpu.vector_store %arg3[%c0_55, %c0_56], %263 {strides = array<i32>} : memref<16x128xf32, #tpu.memory_space<vmem>>, vector<16x128xf32>,
    return
  }
}

</mosaic_0001>

<llo_original>
// kernel: tpu_custom_call.1
$region0: #{tpu_custom_call.1}
  #allocation0 [shape = 'u32[]', space=smem, size = 0x4, offset = 0x4, fixed_abs, tag = 'smem constant byte address 0x4 - core index']
  #allocation1 [shape = 'u32[144,128]{1,0:T(1,128)}', space=vmem, size = 0x12000, scoped, tag = 'internal scratch']
  #allocation2 [shape = 'f32[16,128]{1,0:T(8,128)}', space=vmem, size = 0x2000, scoped, tag = 'scratch operand']
  %s0 = inlined_call_operand.vmem [shape: s32[16,1], index: 0, kind: input, shape index: {}]
  %s1 = inlined_call_operand.hbm [shape: f32[192,384], index: 1, kind: input, shape index: {}]
  %s2 = inlined_call_operand.hbm [shape: f32[136,128], index: 2, kind: input, shape index: {}]
  %s3 = inlined_call_operand.hbm [shape: f32[16,128], index: 3, kind: output, shape index: {}]
  %s4 = sld [smem:[#allocation0]]
  $region30: #{tpu_custom_call.1} parent=0
    _
  %s6 = ssub.s32 1, %s4
  %s7 = scalar_select 0, %s6, %s4
  $region1: #{tpu_custom_call.1} parent=0
    #allocation3 [shape = 'u8[294912]{0}', space=vmem, size = 0x48000, scoped, tag = 'input window, operand 1, single buffered']
    #allocation4 [shape = 's32[1]{0}', space=sflag, size = 0x4, scoped, tag = 'scoped memory for tpu_custom_call.1']
    #allocation5 [shape = 's32[1]{0}', space=sflag, size = 0x4, scoped, tag = 'scoped memory for tpu_custom_call.1']
    #allocation6 [shape = 'u8[69632]{0}', space=vmem, size = 0x11000, scoped, tag = 'input window, operand 2, single buffered']
    #allocation7 [shape = 's32[1]{0}', space=sflag, size = 0x4, scoped, tag = 'scoped memory for tpu_custom_call.1']
    #allocation8 [shape = 'u8[8192]{0}', space=vmem, size = 0x2000, scoped, tag = 'output window, operand 0, single buffered']
    %8 = vsyncpa [#allocation4], 0
    %9 = vsyncpa [#allocation7], 0
    %10 = vsyncpa [#allocation5], 0
    // Predicated region
    $region2: #{tpu_custom_call.1} parent=1 // pred_check
      _
    $region3: #{tpu_custom_call.1} parent=1 // pred_check_branch
      %12 = sbr.rel (0) target = $region5
    $region4: #{tpu_custom_call.1} parent=1 // pred_region
      _
    $region5: #{tpu_custom_call.1} parent=1 // pred_fallthru
      _
    // Predicated region
    $region6: #{tpu_custom_call.1} parent=1 // pred_check
      _
    $region7: #{tpu_custom_call.1} parent=1 // pred_check_branch
      %14 = sbr.rel (0) target = $region9
    $region8: #{tpu_custom_call.1} parent=1 // pred_region
      %s16 = ssub.s32 9216, 9216
      %17 = vsyncadd [#allocation4], %s16
      %s18 = sshll.u32 [#allocation3], 4
      %s19 = int_to_ptr.vmem [resolvable:$true] %s18
      %24 = dma.hbm_to_vmem [thread:$0]  %s1, 9216, %s19, [#allocation4], 384, 384, 24
    $region9: #{tpu_custom_call.1} parent=1 // pred_fallthru
      _
    // Predicated region
    $region10: #{tpu_custom_call.1} parent=1 // pred_check
      _
    $region11: #{tpu_custom_call.1} parent=1 // pred_check_branch
      %26 = sbr.rel (0) target = $region13
    $region12: #{tpu_custom_call.1} parent=1 // pred_region
      %s28 = ssub.s32 2176, 2176
      %29 = vsyncadd [#allocation7], %s28
      %s30 = sshll.u32 [#allocation6], 4
      %s31 = int_to_ptr.vmem [resolvable:$true] %s30
      %36 = dma.hbm_to_vmem [thread:$0]  %s2, 2176, %s31, [#allocation7], 128, 128, 8
    $region13: #{tpu_custom_call.1} parent=1 // pred_fallthru
      _
    // Predicated region
    $region14: #{tpu_custom_call.1} parent=1 // pred_check
      _
    $region15: #{tpu_custom_call.1} parent=1 // pred_check_branch
      %38 = sbr.rel (0) target = $region17
    $region16: #{tpu_custom_call.1} parent=1 // pred_region
      %39 = dma.done [#allocation4], 9216
    $region17: #{tpu_custom_call.1} parent=1 // pred_fallthru
      _
    // Predicated region
    $region18: #{tpu_custom_call.1} parent=1 // pred_check
      _
    $region19: #{tpu_custom_call.1} parent=1 // pred_check_branch
      %41 = sbr.rel (0) target = $region21
    $region20: #{tpu_custom_call.1} parent=1 // pred_region
      %42 = dma.done [#allocation7], 2176
    $region21: #{tpu_custom_call.1} parent=1 // pred_fallthru
      _
    %v43 = vld [vmem:[#allocation3] sm:$0xff]
    %v44 = vld [vmem:[#allocation3 + $0x8] sm:$0xff]
    %v45 = vld [vmem:[#allocation3 + $0x10] sm:$0xff]
    %v46 = vld [vmem:[#allocation3 + $0x18] sm:$0xff]
    %v47 = vld [vmem:[#allocation3 + $0x20] sm:$0xff]
    %v48 = vld [vmem:[#allocation3 + $0x28] sm:$0xff]
    %v49 = vld [vmem:[#allocation3 + $0x30] sm:$0xff]
    %v50 = vld [vmem:[#allocation3 + $0x38] sm:$0xff]
    %v51 = vld [vmem:[#allocation3 + $0x40] sm:$0xff]
    %v52 = vld [vmem:[#allocation3 + $0x48] sm:$0xff]
    %v53 = vld [vmem:[#allocation3 + $0x50] sm:$0xff]
    %v54 = vld [vmem:[#allocation3 + $0x58] sm:$0xff]
    %v55 = vld [vmem:[#allocation3 + $0x60] sm:$0xff]
    %v56 = vld [vmem:[#allocation3 + $0x68] sm:$0xff]
    %v57 = vld [vmem:[#allocation3 + $0x70] sm:$0xff]
    %v58 = vld [vmem:[#allocation3 + $0x78] sm:$0xff]
    %v59 = vld [vmem:[#allocation3 + $0x80] sm:$0xff]
    %v60 = vld [vmem:[#allocation3 + $0x88] sm:$0xff]
    %v61 = vld [vmem:[#allocation3 + $0x90] sm:$0xff]
    %v62 = vld [vmem:[#allocation3 + $0x98] sm:$0xff]
    %v63 = vld [vmem:[#allocation3 + $0xa0] sm:$0xff]
    %v64 = vld [vmem:[#allocation3 + $0xa8] sm:$0xff]
    %v65 = vld [vmem:[#allocation3 + $0xb0] sm:$0xff]
    %v66 = vld [vmem:[#allocation3 + $0xb8] sm:$0xff]
    %v67 = vld [vmem:[#allocation3 + $0xc0] sm:$0xff]
    %v68 = vld [vmem:[#allocation3 + $0xc8] sm:$0xff]
    %v69 = vld [vmem:[#allocation3 + $0xd0] sm:$0xff]
    %v70 = vld [vmem:[#allocation3 + $0xd8] sm:$0xff]
    %v71 = vld [vmem:[#allocation3 + $0xe0] sm:$0xff]
    %v72 = vld [vmem:[#allocation3 + $0xe8] sm:$0xff]
    %v73 = vld [vmem:[#allocation3 + $0xf0] sm:$0xff]
    %v74 = vld [vmem:[#allocation3 + $0xf8] sm:$0xff]
    %v75 = vld [vmem:[#allocation3 + $0x100] sm:$0xff]
    %v76 = vld [vmem:[#allocation3 + $0x108] sm:$0xff]
    %v77 = vld [vmem:[#allocation3 + $0x110] sm:$0xff]
    %v78 = vld [vmem:[#allocation3 + $0x118] sm:$0xff]
    %v79 = vld [vmem:[#allocation3 + $0x120] sm:$0xff]
    %v80 = vld [vmem:[#allocation3 + $0x128] sm:$0xff]
    %v81 = vld [vmem:[#allocation3 + $0x130] sm:$0xff]
    %v82 = vld [vmem:[#allocation3 + $0x138] sm:$0xff]
    %v83 = vld [vmem:[#allocation3 + $0x140] sm:$0xff]
    %v84 = vld [vmem:[#allocation3 + $0x148] sm:$0xff]
    %v85 = vld [vmem:[#allocation3 + $0x150] sm:$0xff]
    %v86 = vld [vmem:[#allocation3 + $0x158] sm:$0xff]
    %v87 = vld [vmem:[#allocation3 + $0x160] sm:$0xff]
    %v88 = vld [vmem:[#allocation3 + $0x168] sm:$0xff]
    %v89 = vld [vmem:[#allocation3 + $0x170] sm:$0xff]
    %v90 = vld [vmem:[#allocation3 + $0x178] sm:$0xff]
    %v91 = vld [vmem:[#allocation3 + $0x180] sm:$0xff]
    %v92 = vld [vmem:[#allocation3 + $0x188] sm:$0xff]
    %v93 = vld [vmem:[#allocation3 + $0x190] sm:$0xff]
    %v94 = vld [vmem:[#allocation3 + $0x198] sm:$0xff]
    %v95 = vld [vmem:[#allocation3 + $0x1a0] sm:$0xff]
    %v96 = vld [vmem:[#allocation3 + $0x1a8] sm:$0xff]
    %v97 = vld [vmem:[#allocation3 + $0x1b0] sm:$0xff]
    %v98 = vld [vmem:[#allocation3 + $0x1b8] sm:$0xff]
    %v99 = vld [vmem:[#allocation3 + $0x1c0] sm:$0xff]
    %v100 = vld [vmem:[#allocation3 + $0x1c8] sm:$0xff]
    %v101 = vld [vmem:[#allocation3 + $0x1d0] sm:$0xff]
    %v102 = vld [vmem:[#allocation3 + $0x1d8] sm:$0xff]
    %v103 = vld [vmem:[#allocation3 + $0x1e0] sm:$0xff]
    %v104 = vld [vmem:[#allocation3 + $0x1e8] sm:$0xff]
    %v105 = vld [vmem:[#allocation3 + $0x1f0] sm:$0xff]
    %v106 = vld [vmem:[#allocation3 + $0x1f8] sm:$0xff]
    %v107 = vld [vmem:[#allocation3 + $0x200] sm:$0xff]
    %v108 = vld [vmem:[#allocation3 + $0x208] sm:$0xff]
    %v109 = vld [vmem:[#allocation3 + $0x210] sm:$0xff]
    %v110 = vld [vmem:[#allocation3 + $0x218] sm:$0xff]
    %v111 = vld [vmem:[#allocation3 + $0x220] sm:$0xff]
    %v112 = vld [vmem:[#allocation3 + $0x228] sm:$0x3]
    %v113 = vld [vmem:[#allocation3 + $0x230] sm:$0x3]
    %v114 = vld [vmem:[#allocation3 + $0x238] sm:$0x3]
    %v115 = vld [vmem:[%s0] sm:$0xff]
    %v116 = vld [vmem:[%s0 + $0x8] sm:$0xff]
    %v117 = vlaneseq
    %v118 = vand.u32 %v117, 127
    %119 = vset.pattern.permute.xlu0 0
    %120 = vperm.xlu0 %119, %v115
    %v121 = vpop.permute.xlu0 %120
    %122 = vset.pattern.permute.xlu0 0
    %123 = vperm.xlu0 %122, %v116
    %v124 = vpop.permute.xlu0 %123
    %vm125 = vcmp.eq.s32.totalorder %v118, %v121
    %vm126 = vcmp.eq.s32.totalorder %v118, %v124
    %v127 = vsel %vm125, 1.0, 0.0
    %v128 = vsel %vm126, 1.0, 0.0
    %v129 = vlaneseq
    %v130 = vshrl.u32 %v129, 7
    %v131 = vsub.s32 0, %v130
    %v132 = vrot.slane %v112, %v131
    %v133 = vlaneseq
    %v134 = vshrl.u32 %v133, 7
    %v135 = vsub.s32 0, %v134
    %v136 = vrot.slane %v113, %v135
    %v137 = vlaneseq
    %v138 = vshrl.u32 %v137, 7
    %v139 = vsub.s32 0, %v138
    %v140 = vrot.slane %v114, %v139
    %vm141 = vcmask 457728
    %v143 = vsel %vm141, %v127, 0
    %v146 = vsel %vm141, %v128, 0
    %148 = vmatprep.subr.mxu0 %v44
    %149 = vmatpush1.msra.mxu0 %v43
    %150 = vmatprep.subr.mxu0 %v47
    %151 = vmatpush1.msra.mxu0 %v46
    %152 = vmatprep.subr.mxu0 %v50
    %153 = vmatpush1.msra.mxu0 %v49
    %154 = vmatprep.subr.mxu0 %v53
    %155 = vmatpush1.msra.mxu0 %v52
    %156 = vmatprep.subr.mxu0 %v56
    %157 = vmatpush1.msra.mxu0 %v55
    %158 = vmatprep.subr.mxu0 %v59
    %159 = vmatpush1.msra.mxu0 %v58
    %160 = vmatprep.subr.mxu0 %v62
    %161 = vmatpush1.msra.mxu0 %v61
    %162 = vmatprep.subr.mxu0 0.0
    %163 = vmatpush1.msra.mxu0 0.0
    %164 = vmatprep.subr.mxu0 0.0
    %165 = vmatpush1.msra.mxu0 0.0
    %166 = vmatprep.subr.mxu0 0.0
    %167 = vmatpush1.msra.mxu0 0.0
    %168 = vmatprep.subr.mxu0 0.0
    %169 = vmatpush1.msra.mxu0 0.0
    %170 = vmatprep.subr.mxu0 0.0
    %171 = vmatpush1.msra.mxu0 0.0
    %172 = vmatprep.subr.mxu0 0.0
    %173 = vmatpush1.msra.mxu0 0.0
    %174 = vmatprep.subr.mxu0 0.0
    %175 = vmatpush1.msra.mxu0 0.0
    %176 = vmatprep.subr.mxu0 0.0
    %177 = vmatpush1.msra.mxu0 0.0
    %178 = vmatprep.subr.mxu0 0.0
    %179 = vmatpush1.msra.mxu0 0.0
    %180 = vmatprep.subr.mxu0 0.0
    %181 = vmatpush1.msra.mxu0 0.0
    %182 = vmatprep.subr.mxu0 0.0
    %183 = vmatpush1.msra.mxu0 0.0
    %184 = vmatprep.subr.mxu0 0.0
    %185 = vmatpush1.msra.mxu0 0.0
    %186 = vmatprep.subr.mxu0 0.0
    %187 = vmatpush1.msra.mxu0 0.0
    %188 = vmatprep.subr.mxu0 0.0
    %189 = vmatpush1.msra.mxu0 0.0
    %190 = vmatprep.subr.mxu0 0.0
    %191 = vmatpush1.msra.mxu0 0.0
    %192 = vmatprep.subr.mxu0 0.0
    %193 = vmatpush1.msra.mxu0 0.0
    %194 = vmatprep.subr.mxu0 0.0
    %195 = vmatpush1.msra.mxu0 0.0
    %196 = vmatprep.subr.mxu0 0.0
    %197 = vmatpush1.msra.mxu0 0.0
    %198 = vmatprep.subr.mxu0 0.0
    %199 = vmatpush1.msra.mxu0 0.0
    %200 = vmatprep.subr.mxu0 0.0
    %201 = vmatpush1.msra.mxu0 0.0
    %202 = vmatprep.subr.mxu0 0.0
    %203 = vmatpush1.msra.mxu0 0.0
    %204 = vmatprep.subr.mxu0 0.0
    %205 = vmatpush1.msra.mxu0 0.0
    %206 = vmatprep.subr.mxu0 0.0
    %207 = vmatpush1.msra.mxu0 0.0
    %208 = vmatprep.subr.mxu0 0.0
    %209 = vmatpush1.msra.mxu0 0.0
    %210 = vmatprep.subr.mxu0 0.0
    %211 = vmatpush1.msra.mxu0 0.0
    %212 = vmatprep.mubr.f32.mxu0 0.0
    %213 = vmatmul.mubr.f32.gmra.mrb[0].mxu0 %v143
    %v214 = vpop.f32.mrb[0].mxu0
    %v215 = vadd.f32 %v132, %v214
    %v216 = vpop.f32.mrb[0].mxu0
    %v217 = vadd.f32 %v136, %v216
    %218 = vmatprep.mubr.f32.mxu0 0.0
    %219 = vmatmul.mubr.f32.gmra.mrb[0].mxu0 %v146
    %v220 = vpop.f32.mrb[0].mxu0
    %v221 = vadd.f32 %v132, %v220
    %v222 = vpop.f32.mrb[0].mxu0
    %v223 = vadd.f32 %v136, %v222
    %224 = vdwg.mxu0
    %225 = vmatprep.subr.mxu0 0.0
    %226 = vmatpush1.msra.mxu0 %v45
    %227 = vmatprep.subr.mxu0 0.0
    %228 = vmatpush1.msra.mxu0 %v48
    %229 = vmatprep.subr.mxu0 0.0
    %230 = vmatpush1.msra.mxu0 %v51
    %231 = vmatprep.subr.mxu0 0.0
    %232 = vmatpush1.msra.mxu0 %v54
    %233 = vmatprep.subr.mxu0 0.0
    %234 = vmatpush1.msra.mxu0 %v57
    %235 = vmatprep.subr.mxu0 0.0
    %236 = vmatpush1.msra.mxu0 %v60
    %237 = vmatprep.subr.mxu0 0.0
    %238 = vmatpush1.msra.mxu0 %v63
    %239 = vmatprep.subr.mxu0 0.0
    %240 = vmatpush1.msra.mxu0 0.0
    %241 = vmatprep.subr.mxu0 0.0
    %242 = vmatpush1.msra.mxu0 0.0
    %243 = vmatprep.subr.mxu0 0.0
    %244 = vmatpush1.msra.mxu0 0.0
    %245 = vmatprep.subr.mxu0 0.0
    %246 = vmatpush1.msra.mxu0 0.0
    %247 = vmatprep.subr.mxu0 0.0
    %248 = vmatpush1.msra.mxu0 0.0
    %249 = vmatprep.subr.mxu0 0.0
    %250 = vmatpush1.msra.mxu0 0.0
    %251 = vmatprep.subr.mxu0 0.0
    %252 = vmatpush1.msra.mxu0 0.0
    %253 = vmatprep.subr.mxu0 0.0
    %254 = vmatpush1.msra.mxu0 0.0
    %255 = vmatprep.subr.mxu0 0.0
    %256 = vmatpush1.msra.mxu0 0.0
    %257 = vmatprep.subr.mxu0 0.0
    %258 = vmatpush1.msra.mxu0 0.0
    %259 = vmatprep.subr.mxu0 0.0
    %260 = vmatpush1.msra.mxu0 0.0
    %261 = vmatprep.subr.mxu0 0.0
    %262 = vmatpush1.msra.mxu0 0.0
    %263 = vmatprep.subr.mxu0 0.0
    %264 = vmatpush1.msra.mxu0 0.0
    %265 = vmatprep.subr.mxu0 0.0
    %266 = vmatpush1.msra.mxu0 0.0
    %267 = vmatprep.subr.mxu0 0.0
    %268 = vmatpush1.msra.mxu0 0.0
    %269 = vmatprep.subr.mxu0 0.0
    %270 = vmatpush1.msra.mxu0 0.0
    %271 = vmatprep.subr.mxu0 0.0
    %272 = vmatpush1.msra.mxu0 0.0
    %273 = vmatprep.subr.mxu0 0.0
    %274 = vmatpush1.msra.mxu0 0.0
    %275 = vmatprep.subr.mxu0 0.0
    %276 = vmatpush1.msra.mxu0 0.0
    %277 = vmatprep.subr.mxu0 0.0
    %278 = vmatpush1.msra.mxu0 0.0
    %279 = vmatprep.subr.mxu0 0.0
    %280 = vmatpush1.msra.mxu0 0.0
    %281 = vmatprep.subr.mxu0 0.0
    %282 = vmatpush1.msra.mxu0 0.0
    %283 = vmatprep.subr.mxu0 0.0
    %284 = vmatpush1.msra.mxu0 0.0
    %285 = vmatprep.subr.mxu0 0.0
    %286 = vmatpush1.msra.mxu0 0.0
    %287 = vmatprep.subr.mxu0 0.0
    %288 = vmatpush1.msra.mxu0 0.0
    %289 = vmatprep.mubr.f32.mxu0 0.0
    %290 = vmatmul.mubr.f32.gmra.mrb[0].mxu0 %v143
    %v291 = vpop.f32.mrb[0].mxu0
    %v292 = vadd.f32 %v140, %v291
    %v293 = vpop.f32.mrb[0].mxu0
    %294 = vmatprep.mubr.f32.mxu0 0.0
    %295 = vmatmul.mubr.f32.gmra.mrb[0].mxu0 %v146
    %v296 = vpop.f32.mrb[0].mxu0
    %v297 = vadd.f32 %v140, %v296
    %v298 = vpop.f32.mrb[0].mxu0
    %299 = vdwg.mxu0
    %v300 = vlaneseq
    %v301 = vshrl.u32 %v300, 7
    %v302 = vsub.s32 1, %v301
    %v303 = vrot.slane %v112, %v302
    %304 = vmatprep.subr.mxu0 %v65
    %305 = vmatpush1.msra.mxu0 %v64
    %306 = vmatprep.subr.mxu0 %v68
    %307 = vmatpush1.msra.mxu0 %v67
    %308 = vmatprep.subr.mxu0 %v71
    %309 = vmatpush1.msra.mxu0 %v70
    %310 = vmatprep.subr.mxu0 %v74
    %311 = vmatpush1.msra.mxu0 %v73
    %312 = vmatprep.subr.mxu0 %v77
    %313 = vmatpush1.msra.mxu0 %v76
    %314 = vmatprep.subr.mxu0 %v80
    %315 = vmatpush1.msra.mxu0 %v79
    %316 = vmatprep.subr.mxu0 %v83
    %317 = vmatpush1.msra.mxu0 %v82
    %318 = vmatprep.subr.mxu0 %v86
    %319 = vmatpush1.msra.mxu0 %v85
    %320 = vmatprep.subr.mxu0 %v89
    %321 = vmatpush1.msra.mxu0 %v88
    %322 = vmatprep.subr.mxu0 %v92
    %323 = vmatpush1.msra.mxu0 %v91
    %324 = vmatprep.subr.mxu0 %v95
    %325 = vmatpush1.msra.mxu0 %v94
    %326 = vmatprep.subr.mxu0 %v98
    %327 = vmatpush1.msra.mxu0 %v97
    %328 = vmatprep.subr.mxu0 %v101
    %329 = vmatpush1.msra.mxu0 %v100
    %330 = vmatprep.subr.mxu0 %v104
    %331 = vmatpush1.msra.mxu0 %v103
    %332 = vmatprep.subr.mxu0 %v107
    %333 = vmatpush1.msra.mxu0 %v106
    %334 = vmatprep.subr.mxu0 %v110
    %335 = vmatpush1.msra.mxu0 %v109
    %336 = vmatprep.subr.mxu0 0.0
    %337 = vmatpush1.msra.mxu0 0.0
    %338 = vmatprep.subr.mxu0 0.0
    %339 = vmatpush1.msra.mxu0 0.0
    %340 = vmatprep.subr.mxu0 0.0
    %341 = vmatpush1.msra.mxu0 0.0
    %342 = vmatprep.subr.mxu0 0.0
    %343 = vmatpush1.msra.mxu0 0.0
    %344 = vmatprep.subr.mxu0 0.0
    %345 = vmatpush1.msra.mxu0 0.0
    %346 = vmatprep.subr.mxu0 0.0
    %347 = vmatpush1.msra.mxu0 0.0
    %348 = vmatprep.subr.mxu0 0.0
    %349 = vmatpush1.msra.mxu0 0.0
    %350 = vmatprep.subr.mxu0 0.0
    %351 = vmatpush1.msra.mxu0 0.0
    %352 = vmatprep.subr.mxu0 0.0
    %353 = vmatpush1.msra.mxu0 0.0
    %354 = vmatprep.subr.mxu0 0.0
    %355 = vmatpush1.msra.mxu0 0.0
    %356 = vmatprep.subr.mxu0 0.0
    %357 = vmatpush1.msra.mxu0 0.0
    %358 = vmatprep.subr.mxu0 0.0
    %359 = vmatpush1.msra.mxu0 0.0
    %360 = vmatprep.subr.mxu0 0.0
    %361 = vmatpush1.msra.mxu0 0.0
    %362 = vmatprep.subr.mxu0 0.0
    %363 = vmatpush1.msra.mxu0 0.0
    %364 = vmatprep.subr.mxu0 0.0
    %365 = vmatpush1.msra.mxu0 0.0
    %366 = vmatprep.subr.mxu0 0.0
    %367 = vmatpush1.msra.mxu0 0.0
    %368 = vmatprep.mubr.f32.mxu0 0.0
    %369 = vmatmul.mubr.f32.gmra.mrb[0].mxu0 0.0
    %v370 = vpop.f32.mrb[0].mxu0
    %v371 = vadd.f32 0.0, %v370
    %v372 = vpop.f32.mrb[0].mxu0
    %v373 = vadd.f32 0.0, %v372
    %374 = vdwg.mxu0
    %375 = vmatprep.subr.mxu0 0.0
    %376 = vmatpush1.msra.mxu0 %v66
    %377 = vmatprep.subr.mxu0 0.0
    %378 = vmatpush1.msra.mxu0 %v69
    %379 = vmatprep.subr.mxu0 0.0
    %380 = vmatpush1.msra.mxu0 %v72
    %381 = vmatprep.subr.mxu0 0.0
    %382 = vmatpush1.msra.mxu0 %v75
    %383 = vmatprep.subr.mxu0 0.0
    %384 = vmatpush1.msra.mxu0 %v78
    %385 = vmatprep.subr.mxu0 0.0
    %386 = vmatpush1.msra.mxu0 %v81
    %387 = vmatprep.subr.mxu0 0.0
    %388 = vmatpush1.msra.mxu0 %v84
    %389 = vmatprep.subr.mxu0 0.0
    %390 = vmatpush1.msra.mxu0 %v87
    %391 = vmatprep.subr.mxu0 0.0
    %392 = vmatpush1.msra.mxu0 %v90
    %393 = vmatprep.subr.mxu0 0.0
    %394 = vmatpush1.msra.mxu0 %v93
    %395 = vmatprep.subr.mxu0 0.0
    %396 = vmatpush1.msra.mxu0 %v96
    %397 = vmatprep.subr.mxu0 0.0
    %398 = vmatpush1.msra.mxu0 %v99
    %399 = vmatprep.subr.mxu0 0.0
    %400 = vmatpush1.msra.mxu0 %v102
    %401 = vmatprep.subr.mxu0 0.0
    %402 = vmatpush1.msra.mxu0 %v105
    %403 = vmatprep.subr.mxu0 0.0
    %404 = vmatpush1.msra.mxu0 %v108
    %405 = vmatprep.subr.mxu0 0.0
    %406 = vmatpush1.msra.mxu0 %v111
    %407 = vmatprep.subr.mxu0 0.0
    %408 = vmatpush1.msra.mxu0 0.0
    %409 = vmatprep.subr.mxu0 0.0
    %410 = vmatpush1.msra.mxu0 0.0
    %411 = vmatprep.subr.mxu0 0.0
    %412 = vmatpush1.msra.mxu0 0.0
    %413 = vmatprep.subr.mxu0 0.0
    %414 = vmatpush1.msra.mxu0 0.0
    %415 = vmatprep.subr.mxu0 0.0
    %416 = vmatpush1.msra.mxu0 0.0
    %417 = vmatprep.subr.mxu0 0.0
    %418 = vmatpush1.msra.mxu0 0.0
    %419 = vmatprep.subr.mxu0 0.0
    %420 = vmatpush1.msra.mxu0 0.0
    %421 = vmatprep.subr.mxu0 0.0
    %422 = vmatpush1.msra.mxu0 0.0
    %423 = vmatprep.subr.mxu0 0.0
    %424 = vmatpush1.msra.mxu0 0.0
    %425 = vmatprep.subr.mxu0 0.0
    %426 = vmatpush1.msra.mxu0 0.0
    %427 = vmatprep.subr.mxu0 0.0
    %428 = vmatpush1.msra.mxu0 0.0
    %429 = vmatprep.subr.mxu0 0.0
    %430 = vmatpush1.msra.mxu0 0.0
    %431 = vmatprep.subr.mxu0 0.0
    %432 = vmatpush1.msra.mxu0 0.0
    %433 = vmatprep.subr.mxu0 0.0
    %434 = vmatpush1.msra.mxu0 0.0
    %435 = vmatprep.subr.mxu0 0.0
    %436 = vmatpush1.msra.mxu0 0.0
    %437 = vmatprep.subr.mxu0 0.0
    %438 = vmatpush1.msra.mxu0 0.0
    %439 = vmatprep.mubr.f32.mxu0 0.0
    %440 = vmatmul.mubr.f32.gmra.mrb[0].mxu0 0.0
    %v441 = vpop.f32.mrb[0].mxu0
    %v442 = vadd.f32 0.0, %v441
    %v443 = vpop.f32.mrb[0].mxu0
    %444 = vdwg.mxu0
    %v445 = vadd.f32 %v215, %v371
    %v446 = vxor.u32 %v445, 2147483648
    %v447 = vmul.f32 %v446, 1.442695
    %v448 = vpow.pop %v447
    %v449 = vadd.f32 %v448, 1.0
    %v450 = vrcp.pop %v449
    %v451 = vmul.f32 1.0, %v450
    %v452 = vadd.f32 %v217, %v373
    %v453 = vxor.u32 %v452, 2147483648
    %v454 = vmul.f32 %v453, 1.442695
    %v455 = vpow.pop %v454
    %v456 = vadd.f32 %v455, 1.0
    %v457 = vrcp.pop %v456
    %v458 = vmul.f32 1.0, %v457
    %v459 = vadd.f32 %v442, %v303
    %v460 = vmul.f32 %v451, %v459
    %v461 = vadd.f32 %v292, %v460
    %v462 = vtanh.pop %v461
    %v463 = vsub.f32 1.0, %v458
    %v464 = vmul.f32 %v463, %v462
    %v465 = vmul.f32 %v458, 0.0
    %v466 = vadd.f32 %v464, %v465
    %467 = vst [vmem:[#allocation2] sm:$0x3] %v466
    %468 = vmatprep.subr.mxu0 %v65
    %469 = vmatpush1.msra.mxu0 %v64
    %470 = vmatprep.subr.mxu0 %v68
    %471 = vmatpush1.msra.mxu0 %v67
    %472 = vmatprep.subr.mxu0 %v71
    %473 = vmatpush1.msra.mxu0 %v70
    %474 = vmatprep.subr.mxu0 %v74
    %475 = vmatpush1.msra.mxu0 %v73
    %476 = vmatprep.subr.mxu0 %v77
    %477 = vmatpush1.msra.mxu0 %v76
    %478 = vmatprep.subr.mxu0 %v80
    %479 = vmatpush1.msra.mxu0 %v79
    %480 = vmatprep.subr.mxu0 %v83
    %481 = vmatpush1.msra.mxu0 %v82
    %482 = vmatprep.subr.mxu0 %v86
    %483 = vmatpush1.msra.mxu0 %v85
    %484 = vmatprep.subr.mxu0 %v89
    %485 = vmatpush1.msra.mxu0 %v88
    %486 = vmatprep.subr.mxu0 %v92
    %487 = vmatpush1.msra.mxu0 %v91
    %488 = vmatprep.subr.mxu0 %v95
    %489 = vmatpush1.msra.mxu0 %v94
    %490 = vmatprep.subr.mxu0 %v98
    %491 = vmatpush1.msra.mxu0 %v97
    %492 = vmatprep.subr.mxu0 %v101
    %493 = vmatpush1.msra.mxu0 %v100
    %494 = vmatprep.subr.mxu0 %v104
    %495 = vmatpush1.msra.mxu0 %v103
    %496 = vmatprep.subr.mxu0 %v107
    %497 = vmatpush1.msra.mxu0 %v106
    %498 = vmatprep.subr.mxu0 %v110
    %499 = vmatpush1.msra.mxu0 %v109
    %500 = vmatprep.subr.mxu0 0.0
    %501 = vmatpush1.msra.mxu0 0.0
    %502 = vmatprep.subr.mxu0 0.0
    %503 = vmatpush1.msra.mxu0 0.0
    %504 = vmatprep.subr.mxu0 0.0
    %505 = vmatpush1.msra.mxu0 0.0
    %506 = vmatprep.subr.mxu0 0.0
    %507 = vmatpush1.msra.mxu0 0.0
    %508 = vmatprep.subr.mxu0 0.0
    %509 = vmatpush1.msra.mxu0 0.0
    %510 = vmatprep.subr.mxu0 0.0
    %511 = vmatpush1.msra.mxu0 0.0
    %512 = vmatprep.subr.mxu0 0.0
    %513 = vmatpush1.msra.mxu0 0.0
    %514 = vmatprep.subr.mxu0 0.0
    %515 = vmatpush1.msra.mxu0 0.0
    %516 = vmatprep.subr.mxu0 0.0
    %517 = vmatpush1.msra.mxu0 0.0
    %518 = vmatprep.subr.mxu0 0.0
    %519 = vmatpush1.msra.mxu0 0.0
    %520 = vmatprep.subr.mxu0 0.0
    %521 = vmatpush1.msra.mxu0 0.0
    %522 = vmatprep.subr.mxu0 0.0
    %523 = vmatpush1.msra.mxu0 0.0
    %524 = vmatprep.subr.mxu0 0.0
    %525 = vmatpush1.msra.mxu0 0.0
    %526 = vmatprep.subr.mxu0 0.0
    %527 = vmatpush1.msra.mxu0 0.0
    %528 = vmatprep.subr.mxu0 0.0
    %529 = vmatpush1.msra.mxu0 0.0
    %530 = vmatprep.subr.mxu0 0.0
    %531 = vmatpush1.msra.mxu0 0.0
    %532 = vmatprep.mubr.f32.mxu0 0.0
    %533 = vmatmul.mubr.f32.gmra.mrb[0].mxu0 %v466
    %v534 = vpop.f32.mrb[0].mxu0
    %v535 = vadd.f32 0.0, %v534
    %v536 = vpop.f32.mrb[0].mxu0
    %v537 = vadd.f32 0.0, %v536
    %538 = vdwg.mxu0
    %539 = vmatprep.subr.mxu0 0.0
    %540 = vmatpush1.msra.mxu0 %v66
    %541 = vmatprep.subr.mxu0 0.0
    %542 = vmatpush1.msra.mxu0 %v69
    %543 = vmatprep.subr.mxu0 0.0
    %544 = vmatpush1.msra.mxu0 %v72
    %545 = vmatprep.subr.mxu0 0.0
    %546 = vmatpush1.msra.mxu0 %v75
    %547 = vmatprep.subr.mxu0 0.0
    %548 = vmatpush1.msra.mxu0 %v78
    %549 = vmatprep.subr.mxu0 0.0
    %550 = vmatpush1.msra.mxu0 %v81
    %551 = vmatprep.subr.mxu0 0.0
    %552 = vmatpush1.msra.mxu0 %v84
    %553 = vmatprep.subr.mxu0 0.0
    %554 = vmatpush1.msra.mxu0 %v87
    %555 = vmatprep.subr.mxu0 0.0
    %556 = vmatpush1.msra.mxu0 %v90
    %557 = vmatprep.subr.mxu0 0.0
    %558 = vmatpush1.msra.mxu0 %v93
    %559 = vmatprep.subr.mxu0 0.0
    %560 = vmatpush1.msra.mxu0 %v96
    %561 = vmatprep.subr.mxu0 0.0
    %562 = vmatpush1.msra.mxu0 %v99
    %563 = vmatprep.subr.mxu0 0.0
    %564 = vmatpush1.msra.mxu0 %v102
    %565 = vmatprep.subr.mxu0 0.0
    %566 = vmatpush1.msra.mxu0 %v105
    %567 = vmatprep.subr.mxu0 0.0
    %568 = vmatpush1.msra.mxu0 %v108
    %569 = vmatprep.subr.mxu0 0.0
    %570 = vmatpush1.msra.mxu0 %v111
    %571 = vmatprep.subr.mxu0 0.0
    %572 = vmatpush1.msra.mxu0 0.0
    %573 = vmatprep.subr.mxu0 0.0
    %574 = vmatpush1.msra.mxu0 0.0
    %575 = vmatprep.subr.mxu0 0.0
    %576 = vmatpush1.msra.mxu0 0.0
    %577 = vmatprep.subr.mxu0 0.0
    %578 = vmatpush1.msra.mxu0 0.0
    %579 = vmatprep.subr.mxu0 0.0
    %580 = vmatpush1.msra.mxu0 0.0
    %581 = vmatprep.subr.mxu0 0.0
    %582 = vmatpush1.msra.mxu0 0.0
    %583 = vmatprep.subr.mxu0 0.0
    %584 = vmatpush1.msra.mxu0 0.0
    %585 = vmatprep.subr.mxu0 0.0
    %586 = vmatpush1.msra.mxu0 0.0
    %587 = vmatprep.subr.mxu0 0.0
    %588 = vmatpush1.msra.mxu0 0.0
    %589 = vmatprep.subr.mxu0 0.0
    %590 = vmatpush1.msra.mxu0 0.0
    %591 = vmatprep.subr.mxu0 0.0
    %592 = vmatpush1.msra.mxu0 0.0
    %593 = vmatprep.subr.mxu0 0.0
    %594 = vmatpush1.msra.mxu0 0.0
    %595 = vmatprep.subr.mxu0 0.0
    %596 = vmatpush1.msra.mxu0 0.0
    %597 = vmatprep.subr.mxu0 0.0
    %598 = vmatpush1.msra.mxu0 0.0
    %599 = vmatprep.subr.mxu0 0.0
    %600 = vmatpush1.msra.mxu0 0.0
    %601 = vmatprep.subr.mxu0 0.0
    %602 = vmatpush1.msra.mxu0 0.0
    %603 = vmatprep.mubr.f32.mxu0 0.0
    %604 = vmatmul.mubr.f32.gmra.mrb[0].mxu0 %v466
    %v605 = vpop.f32.mrb[0].mxu0
    %v606 = vadd.f32 0.0, %v605
    %v607 = vpop.f32.mrb[0].mxu0
    %608 = vdwg.mxu0
    %v610 = vrot.slane %v535, 6
    %v612 = vadd.f32 %v215, %v610
    %v613 = vxor.u32 %v612, 2147483648
    %v614 = vmul.f32 %v613, 1.442695
    %v615 = vpow.pop %v614
    %v616 = vadd.f32 %v615, 1.0
    %v617 = vrcp.pop %v616
    %v618 = vmul.f32 1.0, %v617
    %v620 = vrot.slane %v537, 6
    %v622 = vadd.f32 %v217, %v620
    %v623 = vxor.u32 %v622, 2147483648
    %v624 = vmul.f32 %v623, 1.442695
    %v625 = vpow.pop %v624
    %v626 = vadd.f32 %v625, 1.0
    %v627 = vrcp.pop %v626
    %v628 = vmul.f32 1.0, %v627
    %v629 = vadd.f32 %v606, %v303
    %v631 = vrot.slane %v629, 6
    %v633 = vmul.f32 %v618, %v631
    %v634 = vadd.f32 %v292, %v633
    %v635 = vtanh.pop %v634
    %v636 = vsub.f32 1.0, %v628
    %v637 = vmul.f32 %v636, %v635
    %v639 = vrot.slane %v466, 6
    %v641 = vmul.f32 %v628, %v639
    %v642 = vadd.f32 %v637, %v641
    %643 = vst [vmem:[#allocation2] sm:$0xc] %v642
    %v645 = vrot.slane %v642, 2
    %647 = vmatprep.subr.mxu0 %v65
    %648 = vmatpush1.msra.mxu0 %v64
    %649 = vmatprep.subr.mxu0 %v68
    %650 = vmatpush1.msra.mxu0 %v67
    %651 = vmatprep.subr.mxu0 %v71
    %652 = vmatpush1.msra.mxu0 %v70
    %653 = vmatprep.subr.mxu0 %v74
    %654 = vmatpush1.msra.mxu0 %v73
    %655 = vmatprep.subr.mxu0 %v77
    %656 = vmatpush1.msra.mxu0 %v76
    %657 = vmatprep.subr.mxu0 %v80
    %658 = vmatpush1.msra.mxu0 %v79
    %659 = vmatprep.subr.mxu0 %v83
    %660 = vmatpush1.msra.mxu0 %v82
    %661 = vmatprep.subr.mxu0 %v86
    %662 = vmatpush1.msra.mxu0 %v85
    %663 = vmatprep.subr.mxu0 %v89
    %664 = vmatpush1.msra.mxu0 %v88
    %665 = vmatprep.subr.mxu0 %v92
    %666 = vmatpush1.msra.mxu0 %v91
    %667 = vmatprep.subr.mxu0 %v95
    %668 = vmatpush1.msra.mxu0 %v94
    %669 = vmatprep.subr.mxu0 %v98
    %670 = vmatpush1.msra.mxu0 %v97
    %671 = vmatprep.subr.mxu0 %v101
    %672 = vmatpush1.msra.mxu0 %v100
    %673 = vmatprep.subr.mxu0 %v104
    %674 = vmatpush1.msra.mxu0 %v103
    %675 = vmatprep.subr.mxu0 %v107
    %676 = vmatpush1.msra.mxu0 %v106
    %677 = vmatprep.subr.mxu0 %v110
    %678 = vmatpush1.msra.mxu0 %v109
    %679 = vmatprep.subr.mxu0 0.0
    %680 = vmatpush1.msra.mxu0 0.0
    %681 = vmatprep.subr.mxu0 0.0
    %682 = vmatpush1.msra.mxu0 0.0
    %683 = vmatprep.subr.mxu0 0.0
    %684 = vmatpush1.msra.mxu0 0.0
    %685 = vmatprep.subr.mxu0 0.0
    %686 = vmatpush1.msra.mxu0 0.0
    %687 = vmatprep.subr.mxu0 0.0
    %688 = vmatpush1.msra.mxu0 0.0
    %689 = vmatprep.subr.mxu0 0.0
    %690 = vmatpush1.msra.mxu0 0.0
    %691 = vmatprep.subr.mxu0 0.0
    %692 = vmatpush1.msra.mxu0 0.0
    %693 = vmatprep.subr.mxu0 0.0
    %694 = vmatpush1.msra.mxu0 0.0
    %695 = vmatprep.subr.mxu0 0.0
    %696 = vmatpush1.msra.mxu0 0.0
    %697 = vmatprep.subr.mxu0 0.0
    %698 = vmatpush1.msra.mxu0 0.0
    %699 = vmatprep.subr.mxu0 0.0
    %700 = vmatpush1.msra.mxu0 0.0
    %701 = vmatprep.subr.mxu0 0.0
    %702 = vmatpush1.msra.mxu0 0.0
    %703 = vmatprep.subr.mxu0 0.0
    %704 = vmatpush1.msra.mxu0 0.0
    %705 = vmatprep.subr.mxu0 0.0
    %706 = vmatpush1.msra.mxu0 0.0
    %707 = vmatprep.subr.mxu0 0.0
    %708 = vmatpush1.msra.mxu0 0.0
    %709 = vmatprep.subr.mxu0 0.0
    %710 = vmatpush1.msra.mxu0 0.0
    %711 = vmatprep.mubr.f32.mxu0 0.0
    %712 = vmatmul.mubr.f32.gmra.mrb[0].mxu0 %v645
    %v713 = vpop.f32.mrb[0].mxu0
    %v714 = vadd.f32 0.0, %v713
    %v715 = vpop.f32.mrb[0].mxu0
    %v716 = vadd.f32 0.0, %v715
    %717 = vdwg.mxu0
    %718 = vmatprep.subr.mxu0 0.0
    %719 = vmatpush1.msra.mxu0 %v66
    %720 = vmatprep.subr.mxu0 0.0
    %721 = vmatpush1.msra.mxu0 %v69
    %722 = vmatprep.subr.mxu0 0.0
    %723 = vmatpush1.msra.mxu0 %v72
    %724 = vmatprep.subr.mxu0 0.0
    %725 = vmatpush1.msra.mxu0 %v75
    %726 = vmatprep.subr.mxu0 0.0
    %727 = vmatpush1.msra.mxu0 %v78
    %728 = vmatprep.subr.mxu0 0.0
    %729 = vmatpush1.msra.mxu0 %v81
    %730 = vmatprep.subr.mxu0 0.0
    %731 = vmatpush1.msra.mxu0 %v84
    %732 = vmatprep.subr.mxu0 0.0
    %733 = vmatpush1.msra.mxu0 %v87
    %734 = vmatprep.subr.mxu0 0.0
    %735 = vmatpush1.msra.mxu0 %v90
    %736 = vmatprep.subr.mxu0 0.0
    %737 = vmatpush1.msra.mxu0 %v93
    %738 = vmatprep.subr.mxu0 0.0
    %739 = vmatpush1.msra.mxu0 %v96
    %740 = vmatprep.subr.mxu0 0.0
    %741 = vmatpush1.msra.mxu0 %v99
    %742 = vmatprep.subr.mxu0 0.0
    %743 = vmatpush1.msra.mxu0 %v102
    %744 = vmatprep.subr.mxu0 0.0
    %745 = vmatpush1.msra.mxu0 %v105
    %746 = vmatprep.subr.mxu0 0.0
    %747 = vmatpush1.msra.mxu0 %v108
    %748 = vmatprep.subr.mxu0 0.0
    %749 = vmatpush1.msra.mxu0 %v111
    %750 = vmatprep.subr.mxu0 0.0
    %751 = vmatpush1.msra.mxu0 0.0
    %752 = vmatprep.subr.mxu0 0.0
    %753 = vmatpush1.msra.mxu0 0.0
    %754 = vmatprep.subr.mxu0 0.0
    %755 = vmatpush1.msra.mxu0 0.0
    %756 = vmatprep.subr.mxu0 0.0
    %757 = vmatpush1.msra.mxu0 0.0
    %758 = vmatprep.subr.mxu0 0.0
    %759 = vmatpush1.msra.mxu0 0.0
    %760 = vmatprep.subr.mxu0 0.0
    %761 = vmatpush1.msra.mxu0 0.0
    %762 = vmatprep.subr.mxu0 0.0
    %763 = vmatpush1.msra.mxu0 0.0
    %764 = vmatprep.subr.mxu0 0.0
    %765 = vmatpush1.msra.mxu0 0.0
    %766 = vmatprep.subr.mxu0 0.0
    %767 = vmatpush1.msra.mxu0 0.0
    %768 = vmatprep.subr.mxu0 0.0
    %769 = vmatpush1.msra.mxu0 0.0
    %770 = vmatprep.subr.mxu0 0.0
    %771 = vmatpush1.msra.mxu0 0.0
    %772 = vmatprep.subr.mxu0 0.0
    %773 = vmatpush1.msra.mxu0 0.0
    %774 = vmatprep.subr.mxu0 0.0
    %775 = vmatpush1.msra.mxu0 0.0
    %776 = vmatprep.subr.mxu0 0.0
    %777 = vmatpush1.msra.mxu0 0.0
    %778 = vmatprep.subr.mxu0 0.0
    %779 = vmatpush1.msra.mxu0 0.0
    %780 = vmatprep.subr.mxu0 0.0
    %781 = vmatpush1.msra.mxu0 0.0
    %782 = vmatprep.mubr.f32.mxu0 0.0
    %783 = vmatmul.mubr.f32.gmra.mrb[0].mxu0 %v645
    %v784 = vpop.f32.mrb[0].mxu0
    %v785 = vadd.f32 0.0, %v784
    %v786 = vpop.f32.mrb[0].mxu0
    %787 = vdwg.mxu0
    %v789 = vrot.slane %v714, 4
    %v791 = vadd.f32 %v215, %v789
    %v792 = vxor.u32 %v791, 2147483648
    %v793 = vmul.f32 %v792, 1.442695
    %v794 = vpow.pop %v793
    %v795 = vadd.f32 %v794, 1.0
    %v796 = vrcp.pop %v795
    %v797 = vmul.f32 1.0, %v796
    %v799 = vrot.slane %v716, 4
    %v801 = vadd.f32 %v217, %v799
    %v802 = vxor.u32 %v801, 2147483648
    %v803 = vmul.f32 %v802, 1.442695
    %v804 = vpow.pop %v803
    %v805 = vadd.f32 %v804, 1.0
    %v806 = vrcp.pop %v805
    %v807 = vmul.f32 1.0, %v806
    %v808 = vadd.f32 %v785, %v303
    %v810 = vrot.slane %v808, 4
    %v812 = vmul.f32 %v797, %v810
    %v813 = vadd.f32 %v292, %v812
    %v814 = vtanh.pop %v813
    %v815 = vsub.f32 1.0, %v807
    %v816 = vmul.f32 %v815, %v814
    %v817 = vrot.slane %v642, 6
    %v819 = vmul.f32 %v807, %v817
    %v820 = vadd.f32 %v816, %v819
    %821 = vst [vmem:[#allocation2] sm:$0x30] %v820
    %v823 = vrot.slane %v820, 4
    %825 = vmatprep.subr.mxu0 %v65
    %826 = vmatpush1.msra.mxu0 %v64
    %827 = vmatprep.subr.mxu0 %v68
    %828 = vmatpush1.msra.mxu0 %v67
    %829 = vmatprep.subr.mxu0 %v71
    %830 = vmatpush1.msra.mxu0 %v70
    %831 = vmatprep.subr.mxu0 %v74
    %832 = vmatpush1.msra.mxu0 %v73
    %833 = vmatprep.subr.mxu0 %v77
    %834 = vmatpush1.msra.mxu0 %v76
    %835 = vmatprep.subr.mxu0 %v80
    %836 = vmatpush1.msra.mxu0 %v79
    %837 = vmatprep.subr.mxu0 %v83
    %838 = vmatpush1.msra.mxu0 %v82
    %839 = vmatprep.subr.mxu0 %v86
    %840 = vmatpush1.msra.mxu0 %v85
    %841 = vmatprep.subr.mxu0 %v89
    %842 = vmatpush1.msra.mxu0 %v88
    %843 = vmatprep.subr.mxu0 %v92
    %844 = vmatpush1.msra.mxu0 %v91
    %845 = vmatprep.subr.mxu0 %v95
    %846 = vmatpush1.msra.mxu0 %v94
    %847 = vmatprep.subr.mxu0 %v98
    %848 = vmatpush1.msra.mxu0 %v97
    %849 = vmatprep.subr.mxu0 %v101
    %850 = vmatpush1.msra.mxu0 %v100
    %851 = vmatprep.subr.mxu0 %v104
    %852 = vmatpush1.msra.mxu0 %v103
    %853 = vmatprep.subr.mxu0 %v107
    %854 = vmatpush1.msra.mxu0 %v106
    %855 = vmatprep.subr.mxu0 %v110
    %856 = vmatpush1.msra.mxu0 %v109
    %857 = vmatprep.subr.mxu0 0.0
    %858 = vmatpush1.msra.mxu0 0.0
    %859 = vmatprep.subr.mxu0 0.0
    %860 = vmatpush1.msra.mxu0 0.0
    %861 = vmatprep.subr.mxu0 0.0
    %862 = vmatpush1.msra.mxu0 0.0
    %863 = vmatprep.subr.mxu0 0.0
    %864 = vmatpush1.msra.mxu0 0.0
    %865 = vmatprep.subr.mxu0 0.0
    %866 = vmatpush1.msra.mxu0 0.0
    %867 = vmatprep.subr.mxu0 0.0
    %868 = vmatpush1.msra.mxu0 0.0
    %869 = vmatprep.subr.mxu0 0.0
    %870 = vmatpush1.msra.mxu0 0.0
    %871 = vmatprep.subr.mxu0 0.0
    %872 = vmatpush1.msra.mxu0 0.0
    %873 = vmatprep.subr.mxu0 0.0
    %874 = vmatpush1.msra.mxu0 0.0
    %875 = vmatprep.subr.mxu0 0.0
    %876 = vmatpush1.msra.mxu0 0.0
    %877 = vmatprep.subr.mxu0 0.0
    %878 = vmatpush1.msra.mxu0 0.0
    %879 = vmatprep.subr.mxu0 0.0
    %880 = vmatpush1.msra.mxu0 0.0
    %881 = vmatprep.subr.mxu0 0.0
    %882 = vmatpush1.msra.mxu0 0.0
    %883 = vmatprep.subr.mxu0 0.0
    %884 = vmatpush1.msra.mxu0 0.0
    %885 = vmatprep.subr.mxu0 0.0
    %886 = vmatpush1.msra.mxu0 0.0
    %887 = vmatprep.subr.mxu0 0.0
    %888 = vmatpush1.msra.mxu0 0.0
    %889 = vmatprep.mubr.f32.mxu0 0.0
    %890 = vmatmul.mubr.f32.gmra.mrb[0].mxu0 %v823
    %v891 = vpop.f32.mrb[0].mxu0
    %v892 = vadd.f32 0.0, %v891
    %v893 = vpop.f32.mrb[0].mxu0
    %v894 = vadd.f32 0.0, %v893
    %895 = vdwg.mxu0
    %896 = vmatprep.subr.mxu0 0.0
    %897 = vmatpush1.msra.mxu0 %v66
    %898 = vmatprep.subr.mxu0 0.0
    %899 = vmatpush1.msra.mxu0 %v69
    %900 = vmatprep.subr.mxu0 0.0
    %901 = vmatpush1.msra.mxu0 %v72
    %902 = vmatprep.subr.mxu0 0.0
    %903 = vmatpush1.msra.mxu0 %v75
    %904 = vmatprep.subr.mxu0 0.0
    %905 = vmatpush1.msra.mxu0 %v78
    %906 = vmatprep.subr.mxu0 0.0
    %907 = vmatpush1.msra.mxu0 %v81
    %908 = vmatprep.subr.mxu0 0.0
    %909 = vmatpush1.msra.mxu0 %v84
    %910 = vmatprep.subr.mxu0 0.0
    %911 = vmatpush1.msra.mxu0 %v87
    %912 = vmatprep.subr.mxu0 0.0
    %913 = vmatpush1.msra.mxu0 %v90
    %914 = vmatprep.subr.mxu0 0.0
    %915 = vmatpush1.msra.mxu0 %v93
    %916 = vmatprep.subr.mxu0 0.0
    %917 = vmatpush1.msra.mxu0 %v96
    %918 = vmatprep.subr.mxu0 0.0
    %919 = vmatpush1.msra.mxu0 %v99
    %920 = vmatprep.subr.mxu0 0.0
    %921 = vmatpush1.msra.mxu0 %v102
    %922 = vmatprep.subr.mxu0 0.0
    %923 = vmatpush1.msra.mxu0 %v105
    %924 = vmatprep.subr.mxu0 0.0
    %925 = vmatpush1.msra.mxu0 %v108
    %926 = vmatprep.subr.mxu0 0.0
    %927 = vmatpush1.msra.mxu0 %v111
    %928 = vmatprep.subr.mxu0 0.0
    %929 = vmatpush1.msra.mxu0 0.0
    %930 = vmatprep.subr.mxu0 0.0
    %931 = vmatpush1.msra.mxu0 0.0
    %932 = vmatprep.subr.mxu0 0.0
    %933 = vmatpush1.msra.mxu0 0.0
    %934 = vmatprep.subr.mxu0 0.0
    %935 = vmatpush1.msra.mxu0 0.0
    %936 = vmatprep.subr.mxu0 0.0
    %937 = vmatpush1.msra.mxu0 0.0
    %938 = vmatprep.subr.mxu0 0.0
    %939 = vmatpush1.msra.mxu0 0.0
    %940 = vmatprep.subr.mxu0 0.0
    %941 = vmatpush1.msra.mxu0 0.0
    %942 = vmatprep.subr.mxu0 0.0
    %943 = vmatpush1.msra.mxu0 0.0
    %944 = vmatprep.subr.mxu0 0.0
    %945 = vmatpush1.msra.mxu0 0.0
    %946 = vmatprep.subr.mxu0 0.0
    %947 = vmatpush1.msra.mxu0 0.0
    %948 = vmatprep.subr.mxu0 0.0
    %949 = vmatpush1.msra.mxu0 0.0
    %950 = vmatprep.subr.mxu0 0.0
    %951 = vmatpush1.msra.mxu0 0.0
    %952 = vmatprep.subr.mxu0 0.0
    %953 = vmatpush1.msra.mxu0 0.0
    %954 = vmatprep.subr.mxu0 0.0
    %955 = vmatpush1.msra.mxu0 0.0
    %956 = vmatprep.subr.mxu0 0.0
    %957 = vmatpush1.msra.mxu0 0.0
    %958 = vmatprep.subr.mxu0 0.0
    %959 = vmatpush1.msra.mxu0 0.0
    %960 = vmatprep.mubr.f32.mxu0 0.0
    %961 = vmatmul.mubr.f32.gmra.mrb[0].mxu0 %v823
    %v962 = vpop.f32.mrb[0].mxu0
    %v963 = vadd.f32 0.0, %v962
    %v964 = vpop.f32.mrb[0].mxu0
    %965 = vdwg.mxu0
    %v967 = vrot.slane %v892, 2
    %v969 = vadd.f32 %v215, %v967
    %v970 = vxor.u32 %v969, 2147483648
    %v971 = vmul.f32 %v970, 1.442695
    %v972 = vpow.pop %v971
    %v973 = vadd.f32 %v972, 1.0
    %v974 = vrcp.pop %v973
    %v975 = vmul.f32 1.0, %v974
    %v977 = vrot.slane %v894, 2
    %v979 = vadd.f32 %v217, %v977
    %v980 = vxor.u32 %v979, 2147483648
    %v981 = vmul.f32 %v980, 1.442695
    %v982 = vpow.pop %v981
    %v983 = vadd.f32 %v982, 1.0
    %v984 = vrcp.pop %v983
    %v985 = vmul.f32 1.0, %v984
    %v986 = vadd.f32 %v963, %v303
    %v988 = vrot.slane %v986, 2
    %v990 = vmul.f32 %v975, %v988
    %v991 = vadd.f32 %v292, %v990
    %v992 = vtanh.pop %v991
    %v993 = vsub.f32 1.0, %v985
    %v994 = vmul.f32 %v993, %v992
    %v995 = vrot.slane %v820, 6
    %v997 = vmul.f32 %v985, %v995
    %v998 = vadd.f32 %v994, %v997
    %999 = vst [vmem:[#allocation2] sm:$0xc0] %v998
    %v1001 = vrot.slane %v998, 6
    %1003 = vmatprep.subr.mxu0 %v65
    %1004 = vmatpush1.msra.mxu0 %v64
    %1005 = vmatprep.subr.mxu0 %v68
    %1006 = vmatpush1.msra.mxu0 %v67
    %1007 = vmatprep.subr.mxu0 %v71
    %1008 = vmatpush1.msra.mxu0 %v70
    %1009 = vmatprep.subr.mxu0 %v74
    %1010 = vmatpush1.msra.mxu0 %v73
    %1011 = vmatprep.subr.mxu0 %v77
    %1012 = vmatpush1.msra.mxu0 %v76
    %1013 = vmatprep.subr.mxu0 %v80
    %1014 = vmatpush1.msra.mxu0 %v79
    %1015 = vmatprep.subr.mxu0 %v83
    %1016 = vmatpush1.msra.mxu0 %v82
    %1017 = vmatprep.subr.mxu0 %v86
    %1018 = vmatpush1.msra.mxu0 %v85
    %1019 = vmatprep.subr.mxu0 %v89
    %1020 = vmatpush1.msra.mxu0 %v88
    %1021 = vmatprep.subr.mxu0 %v92
    %1022 = vmatpush1.msra.mxu0 %v91
    %1023 = vmatprep.subr.mxu0 %v95
    %1024 = vmatpush1.msra.mxu0 %v94
    %1025 = vmatprep.subr.mxu0 %v98
    %1026 = vmatpush1.msra.mxu0 %v97
    %1027 = vmatprep.subr.mxu0 %v101
    %1028 = vmatpush1.msra.mxu0 %v100
    %1029 = vmatprep.subr.mxu0 %v104
    %1030 = vmatpush1.msra.mxu0 %v103
    %1031 = vmatprep.subr.mxu0 %v107
    %1032 = vmatpush1.msra.mxu0 %v106
    %1033 = vmatprep.subr.mxu0 %v110
    %1034 = vmatpush1.msra.mxu0 %v109
    %1035 = vmatprep.subr.mxu0 0.0
    %1036 = vmatpush1.msra.mxu0 0.0
    %1037 = vmatprep.subr.mxu0 0.0
    %1038 = vmatpush1.msra.mxu0 0.0
    %1039 = vmatprep.subr.mxu0 0.0
    %1040 = vmatpush1.msra.mxu0 0.0
    %1041 = vmatprep.subr.mxu0 0.0
    %1042 = vmatpush1.msra.mxu0 0.0
    %1043 = vmatprep.subr.mxu0 0.0
    %1044 = vmatpush1.msra.mxu0 0.0
    %1045 = vmatprep.subr.mxu0 0.0
    %1046 = vmatpush1.msra.mxu0 0.0
    %1047 = vmatprep.subr.mxu0 0.0
    %1048 = vmatpush1.msra.mxu0 0.0
    %1049 = vmatprep.subr.mxu0 0.0
    %1050 = vmatpush1.msra.mxu0 0.0
    %1051 = vmatprep.subr.mxu0 0.0
    %1052 = vmatpush1.msra.mxu0 0.0
    %1053 = vmatprep.subr.mxu0 0.0
    %1054 = vmatpush1.msra.mxu0 0.0
    %1055 = vmatprep.subr.mxu0 0.0
    %1056 = vmatpush1.msra.mxu0 0.0
    %1057 = vmatprep.subr.mxu0 0.0
    %1058 = vmatpush1.msra.mxu0 0.0
    %1059 = vmatprep.subr.mxu0 0.0
    %1060 = vmatpush1.msra.mxu0 0.0
    %1061 = vmatprep.subr.mxu0 0.0
    %1062 = vmatpush1.msra.mxu0 0.0
    %1063 = vmatprep.subr.mxu0 0.0
    %1064 = vmatpush1.msra.mxu0 0.0
    %1065 = vmatprep.subr.mxu0 0.0
    %1066 = vmatpush1.msra.mxu0 0.0
    %1067 = vmatprep.mubr.f32.mxu0 0.0
    %1068 = vmatmul.mubr.f32.gmra.mrb[0].mxu0 %v1001
    %v1069 = vpop.f32.mrb[0].mxu0
    %v1070 = vadd.f32 0.0, %v1069
    %v1071 = vpop.f32.mrb[0].mxu0
    %v1072 = vadd.f32 0.0, %v1071
    %1073 = vdwg.mxu0
    %1074 = vmatprep.subr.mxu0 0.0
    %1075 = vmatpush1.msra.mxu0 %v66
    %1076 = vmatprep.subr.mxu0 0.0
    %1077 = vmatpush1.msra.mxu0 %v69
    %1078 = vmatprep.subr.mxu0 0.0
    %1079 = vmatpush1.msra.mxu0 %v72
    %1080 = vmatprep.subr.mxu0 0.0
    %1081 = vmatpush1.msra.mxu0 %v75
    %1082 = vmatprep.subr.mxu0 0.0
    %1083 = vmatpush1.msra.mxu0 %v78
    %1084 = vmatprep.subr.mxu0 0.0
    %1085 = vmatpush1.msra.mxu0 %v81
    %1086 = vmatprep.subr.mxu0 0.0
    %1087 = vmatpush1.msra.mxu0 %v84
    %1088 = vmatprep.subr.mxu0 0.0
    %1089 = vmatpush1.msra.mxu0 %v87
    %1090 = vmatprep.subr.mxu0 0.0
    %1091 = vmatpush1.msra.mxu0 %v90
    %1092 = vmatprep.subr.mxu0 0.0
    %1093 = vmatpush1.msra.mxu0 %v93
    %1094 = vmatprep.subr.mxu0 0.0
    %1095 = vmatpush1.msra.mxu0 %v96
    %1096 = vmatprep.subr.mxu0 0.0
    %1097 = vmatpush1.msra.mxu0 %v99
    %1098 = vmatprep.subr.mxu0 0.0
    %1099 = vmatpush1.msra.mxu0 %v102
    %1100 = vmatprep.subr.mxu0 0.0
    %1101 = vmatpush1.msra.mxu0 %v105
    %1102 = vmatprep.subr.mxu0 0.0
    %1103 = vmatpush1.msra.mxu0 %v108
    %1104 = vmatprep.subr.mxu0 0.0
    %1105 = vmatpush1.msra.mxu0 %v111
    %1106 = vmatprep.subr.mxu0 0.0
    %1107 = vmatpush1.msra.mxu0 0.0
    %1108 = vmatprep.subr.mxu0 0.0
    %1109 = vmatpush1.msra.mxu0 0.0
    %1110 = vmatprep.subr.mxu0 0.0
    %1111 = vmatpush1.msra.mxu0 0.0
    %1112 = vmatprep.subr.mxu0 0.0
    %1113 = vmatpush1.msra.mxu0 0.0
    %1114 = vmatprep.subr.mxu0 0.0
    %1115 = vmatpush1.msra.mxu0 0.0
    %1116 = vmatprep.subr.mxu0 0.0
    %1117 = vmatpush1.msra.mxu0 0.0
    %1118 = vmatprep.subr.mxu0 0.0
    %1119 = vmatpush1.msra.mxu0 0.0
    %1120 = vmatprep.subr.mxu0 0.0
    %1121 = vmatpush1.msra.mxu0 0.0
    %1122 = vmatprep.subr.mxu0 0.0
    %1123 = vmatpush1.msra.mxu0 0.0
    %1124 = vmatprep.subr.mxu0 0.0
    %1125 = vmatpush1.msra.mxu0 0.0
    %1126 = vmatprep.subr.mxu0 0.0
    %1127 = vmatpush1.msra.mxu0 0.0
    %1128 = vmatprep.subr.mxu0 0.0
    %1129 = vmatpush1.msra.mxu0 0.0
    %1130 = vmatprep.subr.mxu0 0.0
    %1131 = vmatpush1.msra.mxu0 0.0
    %1132 = vmatprep.subr.mxu0 0.0
    %1133 = vmatpush1.msra.mxu0 0.0
    %1134 = vmatprep.subr.mxu0 0.0
    %1135 = vmatpush1.msra.mxu0 0.0
    %1136 = vmatprep.subr.mxu0 0.0
    %1137 = vmatpush1.msra.mxu0 0.0
    %1138 = vmatprep.mubr.f32.mxu0 0.0
    %1139 = vmatmul.mubr.f32.gmra.mrb[0].mxu0 %v1001
    %v1140 = vpop.f32.mrb[0].mxu0
    %v1141 = vadd.f32 0.0, %v1140
    %v1142 = vpop.f32.mrb[0].mxu0
    %1143 = vdwg.mxu0
    %v1144 = vadd.f32 %v221, %v1070
    %v1145 = vxor.u32 %v1144, 2147483648
    %v1146 = vmul.f32 %v1145, 1.442695
    %v1147 = vpow.pop %v1146
    %v1148 = vadd.f32 %v1147, 1.0
    %v1149 = vrcp.pop %v1148
    %v1150 = vmul.f32 1.0, %v1149
    %v1151 = vadd.f32 %v223, %v1072
    %v1152 = vxor.u32 %v1151, 2147483648
    %v1153 = vmul.f32 %v1152, 1.442695
    %v1154 = vpow.pop %v1153
    %v1155 = vadd.f32 %v1154, 1.0
    %v1156 = vrcp.pop %v1155
    %v1157 = vmul.f32 1.0, %v1156
    %v1158 = vadd.f32 %v1141, %v303
    %v1159 = vmul.f32 %v1150, %v1158
    %v1160 = vadd.f32 %v297, %v1159
    %v1161 = vtanh.pop %v1160
    %v1162 = vsub.f32 1.0, %v1157
    %v1163 = vmul.f32 %v1162, %v1161
    %v1164 = vmul.f32 %v1157, %v1001
    %v1165 = vadd.f32 %v1163, %v1164
    %1166 = vst [vmem:[#allocation2 + $0x8] sm:$0x3] %v1165
    %1167 = vmatprep.subr.mxu0 %v65
    %1168 = vmatpush1.msra.mxu0 %v64
    %1169 = vmatprep.subr.mxu0 %v68
    %1170 = vmatpush1.msra.mxu0 %v67
    %1171 = vmatprep.subr.mxu0 %v71
    %1172 = vmatpush1.msra.mxu0 %v70
    %1173 = vmatprep.subr.mxu0 %v74
    %1174 = vmatpush1.msra.mxu0 %v73
    %1175 = vmatprep.subr.mxu0 %v77
    %1176 = vmatpush1.msra.mxu0 %v76
    %1177 = vmatprep.subr.mxu0 %v80
    %1178 = vmatpush1.msra.mxu0 %v79
    %1179 = vmatprep.subr.mxu0 %v83
    %1180 = vmatpush1.msra.mxu0 %v82
    %1181 = vmatprep.subr.mxu0 %v86
    %1182 = vmatpush1.msra.mxu0 %v85
    %1183 = vmatprep.subr.mxu0 %v89
    %1184 = vmatpush1.msra.mxu0 %v88
    %1185 = vmatprep.subr.mxu0 %v92
    %1186 = vmatpush1.msra.mxu0 %v91
    %1187 = vmatprep.subr.mxu0 %v95
    %1188 = vmatpush1.msra.mxu0 %v94
    %1189 = vmatprep.subr.mxu0 %v98
    %1190 = vmatpush1.msra.mxu0 %v97
    %1191 = vmatprep.subr.mxu0 %v101
    %1192 = vmatpush1.msra.mxu0 %v100
    %1193 = vmatprep.subr.mxu0 %v104
    %1194 = vmatpush1.msra.mxu0 %v103
    %1195 = vmatprep.subr.mxu0 %v107
    %1196 = vmatpush1.msra.mxu0 %v106
    %1197 = vmatprep.subr.mxu0 %v110
    %1198 = vmatpush1.msra.mxu0 %v109
    %1199 = vmatprep.subr.mxu0 0.0
    %1200 = vmatpush1.msra.mxu0 0.0
    %1201 = vmatprep.subr.mxu0 0.0
    %1202 = vmatpush1.msra.mxu0 0.0
    %1203 = vmatprep.subr.mxu0 0.0
    %1204 = vmatpush1.msra.mxu0 0.0
    %1205 = vmatprep.subr.mxu0 0.0
    %1206 = vmatpush1.msra.mxu0 0.0
    %1207 = vmatprep.subr.mxu0 0.0
    %1208 = vmatpush1.msra.mxu0 0.0
    %1209 = vmatprep.subr.mxu0 0.0
    %1210 = vmatpush1.msra.mxu0 0.0
    %1211 = vmatprep.subr.mxu0 0.0
    %1212 = vmatpush1.msra.mxu0 0.0
    %1213 = vmatprep.subr.mxu0 0.0
    %1214 = vmatpush1.msra.mxu0 0.0
    %1215 = vmatprep.subr.mxu0 0.0
    %1216 = vmatpush1.msra.mxu0 0.0
    %1217 = vmatprep.subr.mxu0 0.0
    %1218 = vmatpush1.msra.mxu0 0.0
    %1219 = vmatprep.subr.mxu0 0.0
    %1220 = vmatpush1.msra.mxu0 0.0
    %1221 = vmatprep.subr.mxu0 0.0
    %1222 = vmatpush1.msra.mxu0 0.0
    %1223 = vmatprep.subr.mxu0 0.0
    %1224 = vmatpush1.msra.mxu0 0.0
    %1225 = vmatprep.subr.mxu0 0.0
    %1226 = vmatpush1.msra.mxu0 0.0
    %1227 = vmatprep.subr.mxu0 0.0
    %1228 = vmatpush1.msra.mxu0 0.0
    %1229 = vmatprep.subr.mxu0 0.0
    %1230 = vmatpush1.msra.mxu0 0.0
    %1231 = vmatprep.mubr.f32.mxu0 0.0
    %1232 = vmatmul.mubr.f32.gmra.mrb[0].mxu0 %v1165
    %v1233 = vpop.f32.mrb[0].mxu0
    %v1234 = vadd.f32 0.0, %v1233
    %v1235 = vpop.f32.mrb[0].mxu0
    %v1236 = vadd.f32 0.0, %v1235
    %1237 = vdwg.mxu0
    %1238 = vmatprep.subr.mxu0 0.0
    %1239 = vmatpush1.msra.mxu0 %v66
    %1240 = vmatprep.subr.mxu0 0.0
    %1241 = vmatpush1.msra.mxu0 %v69
    %1242 = vmatprep.subr.mxu0 0.0
    %1243 = vmatpush1.msra.mxu0 %v72
    %1244 = vmatprep.subr.mxu0 0.0
    %1245 = vmatpush1.msra.mxu0 %v75
    %1246 = vmatprep.subr.mxu0 0.0
    %1247 = vmatpush1.msra.mxu0 %v78
    %1248 = vmatprep.subr.mxu0 0.0
    %1249 = vmatpush1.msra.mxu0 %v81
    %1250 = vmatprep.subr.mxu0 0.0
    %1251 = vmatpush1.msra.mxu0 %v84
    %1252 = vmatprep.subr.mxu0 0.0
    %1253 = vmatpush1.msra.mxu0 %v87
    %1254 = vmatprep.subr.mxu0 0.0
    %1255 = vmatpush1.msra.mxu0 %v90
    %1256 = vmatprep.subr.mxu0 0.0
    %1257 = vmatpush1.msra.mxu0 %v93
    %1258 = vmatprep.subr.mxu0 0.0
    %1259 = vmatpush1.msra.mxu0 %v96
    %1260 = vmatprep.subr.mxu0 0.0
    %1261 = vmatpush1.msra.mxu0 %v99
    %1262 = vmatprep.subr.mxu0 0.0
    %1263 = vmatpush1.msra.mxu0 %v102
    %1264 = vmatprep.subr.mxu0 0.0
    %1265 = vmatpush1.msra.mxu0 %v105
    %1266 = vmatprep.subr.mxu0 0.0
    %1267 = vmatpush1.msra.mxu0 %v108
    %1268 = vmatprep.subr.mxu0 0.0
    %1269 = vmatpush1.msra.mxu0 %v111
    %1270 = vmatprep.subr.mxu0 0.0
    %1271 = vmatpush1.msra.mxu0 0.0
    %1272 = vmatprep.subr.mxu0 0.0
    %1273 = vmatpush1.msra.mxu0 0.0
    %1274 = vmatprep.subr.mxu0 0.0
    %1275 = vmatpush1.msra.mxu0 0.0
    %1276 = vmatprep.subr.mxu0 0.0
    %1277 = vmatpush1.msra.mxu0 0.0
    %1278 = vmatprep.subr.mxu0 0.0
    %1279 = vmatpush1.msra.mxu0 0.0
    %1280 = vmatprep.subr.mxu0 0.0
    %1281 = vmatpush1.msra.mxu0 0.0
    %1282 = vmatprep.subr.mxu0 0.0
    %1283 = vmatpush1.msra.mxu0 0.0
    %1284 = vmatprep.subr.mxu0 0.0
    %1285 = vmatpush1.msra.mxu0 0.0
    %1286 = vmatprep.subr.mxu0 0.0
    %1287 = vmatpush1.msra.mxu0 0.0
    %1288 = vmatprep.subr.mxu0 0.0
    %1289 = vmatpush1.msra.mxu0 0.0
    %1290 = vmatprep.subr.mxu0 0.0
    %1291 = vmatpush1.msra.mxu0 0.0
    %1292 = vmatprep.subr.mxu0 0.0
    %1293 = vmatpush1.msra.mxu0 0.0
    %1294 = vmatprep.subr.mxu0 0.0
    %1295 = vmatpush1.msra.mxu0 0.0
    %1296 = vmatprep.subr.mxu0 0.0
    %1297 = vmatpush1.msra.mxu0 0.0
    %1298 = vmatprep.subr.mxu0 0.0
    %1299 = vmatpush1.msra.mxu0 0.0
    %1300 = vmatprep.subr.mxu0 0.0
    %1301 = vmatpush1.msra.mxu0 0.0
    %1302 = vmatprep.mubr.f32.mxu0 0.0
    %1303 = vmatmul.mubr.f32.gmra.mrb[0].mxu0 %v1165
    %v1304 = vpop.f32.mrb[0].mxu0
    %v1305 = vadd.f32 0.0, %v1304
    %v1306 = vpop.f32.mrb[0].mxu0
    %1307 = vdwg.mxu0
    %v1309 = vrot.slane %v1234, 6
    %v1311 = vadd.f32 %v221, %v1309
    %v1312 = vxor.u32 %v1311, 2147483648
    %v1313 = vmul.f32 %v1312, 1.442695
    %v1314 = vpow.pop %v1313
    %v1315 = vadd.f32 %v1314, 1.0
    %v1316 = vrcp.pop %v1315
    %v1317 = vmul.f32 1.0, %v1316
    %v1319 = vrot.slane %v1236, 6
    %v1321 = vadd.f32 %v223, %v1319
    %v1322 = vxor.u32 %v1321, 2147483648
    %v1323 = vmul.f32 %v1322, 1.442695
    %v1324 = vpow.pop %v1323
    %v1325 = vadd.f32 %v1324, 1.0
    %v1326 = vrcp.pop %v1325
    %v1327 = vmul.f32 1.0, %v1326
    %v1328 = vadd.f32 %v1305, %v303
    %v1330 = vrot.slane %v1328, 6
    %v1332 = vmul.f32 %v1317, %v1330
    %v1333 = vadd.f32 %v297, %v1332
    %v1334 = vtanh.pop %v1333
    %v1335 = vsub.f32 1.0, %v1327
    %v1336 = vmul.f32 %v1335, %v1334
    %v1338 = vrot.slane %v1165, 6
    %v1340 = vmul.f32 %v1327, %v1338
    %v1341 = vadd.f32 %v1336, %v1340
    %1342 = vst [vmem:[#allocation2 + $0x8] sm:$0xc] %v1341
    %v1344 = vrot.slane %v1341, 2
    %1346 = vmatprep.subr.mxu0 %v65
    %1347 = vmatpush1.msra.mxu0 %v64
    %1348 = vmatprep.subr.mxu0 %v68
    %1349 = vmatpush1.msra.mxu0 %v67
    %1350 = vmatprep.subr.mxu0 %v71
    %1351 = vmatpush1.msra.mxu0 %v70
    %1352 = vmatprep.subr.mxu0 %v74
    %1353 = vmatpush1.msra.mxu0 %v73
    %1354 = vmatprep.subr.mxu0 %v77
    %1355 = vmatpush1.msra.mxu0 %v76
    %1356 = vmatprep.subr.mxu0 %v80
    %1357 = vmatpush1.msra.mxu0 %v79
    %1358 = vmatprep.subr.mxu0 %v83
    %1359 = vmatpush1.msra.mxu0 %v82
    %1360 = vmatprep.subr.mxu0 %v86
    %1361 = vmatpush1.msra.mxu0 %v85
    %1362 = vmatprep.subr.mxu0 %v89
    %1363 = vmatpush1.msra.mxu0 %v88
    %1364 = vmatprep.subr.mxu0 %v92
    %1365 = vmatpush1.msra.mxu0 %v91
    %1366 = vmatprep.subr.mxu0 %v95
    %1367 = vmatpush1.msra.mxu0 %v94
    %1368 = vmatprep.subr.mxu0 %v98
    %1369 = vmatpush1.msra.mxu0 %v97
    %1370 = vmatprep.subr.mxu0 %v101
    %1371 = vmatpush1.msra.mxu0 %v100
    %1372 = vmatprep.subr.mxu0 %v104
    %1373 = vmatpush1.msra.mxu0 %v103
    %1374 = vmatprep.subr.mxu0 %v107
    %1375 = vmatpush1.msra.mxu0 %v106
    %1376 = vmatprep.subr.mxu0 %v110
    %1377 = vmatpush1.msra.mxu0 %v109
    %1378 = vmatprep.subr.mxu0 0.0
    %1379 = vmatpush1.msra.mxu0 0.0
    %1380 = vmatprep.subr.mxu0 0.0
    %1381 = vmatpush1.msra.mxu0 0.0
    %1382 = vmatprep.subr.mxu0 0.0
    %1383 = vmatpush1.msra.mxu0 0.0
    %1384 = vmatprep.subr.mxu0 0.0
    %1385 = vmatpush1.msra.mxu0 0.0
    %1386 = vmatprep.subr.mxu0 0.0
    %1387 = vmatpush1.msra.mxu0 0.0
    %1388 = vmatprep.subr.mxu0 0.0
    %1389 = vmatpush1.msra.mxu0 0.0
    %1390 = vmatprep.subr.mxu0 0.0
    %1391 = vmatpush1.msra.mxu0 0.0
    %1392 = vmatprep.subr.mxu0 0.0
    %1393 = vmatpush1.msra.mxu0 0.0
    %1394 = vmatprep.subr.mxu0 0.0
    %1395 = vmatpush1.msra.mxu0 0.0
    %1396 = vmatprep.subr.mxu0 0.0
    %1397 = vmatpush1.msra.mxu0 0.0
    %1398 = vmatprep.subr.mxu0 0.0
    %1399 = vmatpush1.msra.mxu0 0.0
    %1400 = vmatprep.subr.mxu0 0.0
    %1401 = vmatpush1.msra.mxu0 0.0
    %1402 = vmatprep.subr.mxu0 0.0
    %1403 = vmatpush1.msra.mxu0 0.0
    %1404 = vmatprep.subr.mxu0 0.0
    %1405 = vmatpush1.msra.mxu0 0.0
    %1406 = vmatprep.subr.mxu0 0.0
    %1407 = vmatpush1.msra.mxu0 0.0
    %1408 = vmatprep.subr.mxu0 0.0
    %1409 = vmatpush1.msra.mxu0 0.0
    %1410 = vmatprep.mubr.f32.mxu0 0.0
    %1411 = vmatmul.mubr.f32.gmra.mrb[0].mxu0 %v1344
    %v1412 = vpop.f32.mrb[0].mxu0
    %v1413 = vadd.f32 0.0, %v1412
    %v1414 = vpop.f32.mrb[0].mxu0
    %v1415 = vadd.f32 0.0, %v1414
    %1416 = vdwg.mxu0
    %1417 = vmatprep.subr.mxu0 0.0
    %1418 = vmatpush1.msra.mxu0 %v66
    %1419 = vmatprep.subr.mxu0 0.0
    %1420 = vmatpush1.msra.mxu0 %v69
    %1421 = vmatprep.subr.mxu0 0.0
    %1422 = vmatpush1.msra.mxu0 %v72
    %1423 = vmatprep.subr.mxu0 0.0
    %1424 = vmatpush1.msra.mxu0 %v75
    %1425 = vmatprep.subr.mxu0 0.0
    %1426 = vmatpush1.msra.mxu0 %v78
    %1427 = vmatprep.subr.mxu0 0.0
    %1428 = vmatpush1.msra.mxu0 %v81
    %1429 = vmatprep.subr.mxu0 0.0
    %1430 = vmatpush1.msra.mxu0 %v84
    %1431 = vmatprep.subr.mxu0 0.0
    %1432 = vmatpush1.msra.mxu0 %v87
    %1433 = vmatprep.subr.mxu0 0.0
    %1434 = vmatpush1.msra.mxu0 %v90
    %1435 = vmatprep.subr.mxu0 0.0
    %1436 = vmatpush1.msra.mxu0 %v93
    %1437 = vmatprep.subr.mxu0 0.0
    %1438 = vmatpush1.msra.mxu0 %v96
    %1439 = vmatprep.subr.mxu0 0.0
    %1440 = vmatpush1.msra.mxu0 %v99
    %1441 = vmatprep.subr.mxu0 0.0
    %1442 = vmatpush1.msra.mxu0 %v102
    %1443 = vmatprep.subr.mxu0 0.0
    %1444 = vmatpush1.msra.mxu0 %v105
    %1445 = vmatprep.subr.mxu0 0.0
    %1446 = vmatpush1.msra.mxu0 %v108
    %1447 = vmatprep.subr.mxu0 0.0
    %1448 = vmatpush1.msra.mxu0 %v111
    %1449 = vmatprep.subr.mxu0 0.0
    %1450 = vmatpush1.msra.mxu0 0.0
    %1451 = vmatprep.subr.mxu0 0.0
    %1452 = vmatpush1.msra.mxu0 0.0
    %1453 = vmatprep.subr.mxu0 0.0
    %1454 = vmatpush1.msra.mxu0 0.0
    %1455 = vmatprep.subr.mxu0 0.0
    %1456 = vmatpush1.msra.mxu0 0.0
    %1457 = vmatprep.subr.mxu0 0.0
    %1458 = vmatpush1.msra.mxu0 0.0
    %1459 = vmatprep.subr.mxu0 0.0
    %1460 = vmatpush1.msra.mxu0 0.0
    %1461 = vmatprep.subr.mxu0 0.0
    %1462 = vmatpush1.msra.mxu0 0.0
    %1463 = vmatprep.subr.mxu0 0.0
    %1464 = vmatpush1.msra.mxu0 0.0
    %1465 = vmatprep.subr.mxu0 0.0
    %1466 = vmatpush1.msra.mxu0 0.0
    %1467 = vmatprep.subr.mxu0 0.0
    %1468 = vmatpush1.msra.mxu0 0.0
    %1469 = vmatprep.subr.mxu0 0.0
    %1470 = vmatpush1.msra.mxu0 0.0
    %1471 = vmatprep.subr.mxu0 0.0
    %1472 = vmatpush1.msra.mxu0 0.0
    %1473 = vmatprep.subr.mxu0 0.0
    %1474 = vmatpush1.msra.mxu0 0.0
    %1475 = vmatprep.subr.mxu0 0.0
    %1476 = vmatpush1.msra.mxu0 0.0
    %1477 = vmatprep.subr.mxu0 0.0
    %1478 = vmatpush1.msra.mxu0 0.0
    %1479 = vmatprep.subr.mxu0 0.0
    %1480 = vmatpush1.msra.mxu0 0.0
    %1481 = vmatprep.mubr.f32.mxu0 0.0
    %1482 = vmatmul.mubr.f32.gmra.mrb[0].mxu0 %v1344
    %v1483 = vpop.f32.mrb[0].mxu0
    %v1484 = vadd.f32 0.0, %v1483
    %v1485 = vpop.f32.mrb[0].mxu0
    %1486 = vdwg.mxu0
    %v1488 = vrot.slane %v1413, 4
    %v1490 = vadd.f32 %v221, %v1488
    %v1491 = vxor.u32 %v1490, 2147483648
    %v1492 = vmul.f32 %v1491, 1.442695
    %v1493 = vpow.pop %v1492
    %v1494 = vadd.f32 %v1493, 1.0
    %v1495 = vrcp.pop %v1494
    %v1496 = vmul.f32 1.0, %v1495
    %v1498 = vrot.slane %v1415, 4
    %v1500 = vadd.f32 %v223, %v1498
    %v1501 = vxor.u32 %v1500, 2147483648
    %v1502 = vmul.f32 %v1501, 1.442695
    %v1503 = vpow.pop %v1502
    %v1504 = vadd.f32 %v1503, 1.0
    %v1505 = vrcp.pop %v1504
    %v1506 = vmul.f32 1.0, %v1505
    %v1507 = vadd.f32 %v1484, %v303
    %v1509 = vrot.slane %v1507, 4
    %v1511 = vmul.f32 %v1496, %v1509
    %v1512 = vadd.f32 %v297, %v1511
    %v1513 = vtanh.pop %v1512
    %v1514 = vsub.f32 1.0, %v1506
    %v1515 = vmul.f32 %v1514, %v1513
    %v1516 = vrot.slane %v1341, 6
    %v1518 = vmul.f32 %v1506, %v1516
    %v1519 = vadd.f32 %v1515, %v1518
    %1520 = vst [vmem:[#allocation2 + $0x8] sm:$0x30] %v1519
    %v1522 = vrot.slane %v1519, 4
    %1524 = vmatprep.subr.mxu0 %v65
    %1525 = vmatpush1.msra.mxu0 %v64
    %1526 = vmatprep.subr.mxu0 %v68
    %1527 = vmatpush1.msra.mxu0 %v67
    %1528 = vmatprep.subr.mxu0 %v71
    %1529 = vmatpush1.msra.mxu0 %v70
    %1530 = vmatprep.subr.mxu0 %v74
    %1531 = vmatpush1.msra.mxu0 %v73
    %1532 = vmatprep.subr.mxu0 %v77
    %1533 = vmatpush1.msra.mxu0 %v76
    %1534 = vmatprep.subr.mxu0 %v80
    %1535 = vmatpush1.msra.mxu0 %v79
    %1536 = vmatprep.subr.mxu0 %v83
    %1537 = vmatpush1.msra.mxu0 %v82
    %1538 = vmatprep.subr.mxu0 %v86
    %1539 = vmatpush1.msra.mxu0 %v85
    %1540 = vmatprep.subr.mxu0 %v89
    %1541 = vmatpush1.msra.mxu0 %v88
    %1542 = vmatprep.subr.mxu0 %v92
    %1543 = vmatpush1.msra.mxu0 %v91
    %1544 = vmatprep.subr.mxu0 %v95
    %1545 = vmatpush1.msra.mxu0 %v94
    %1546 = vmatprep.subr.mxu0 %v98
    %1547 = vmatpush1.msra.mxu0 %v97
    %1548 = vmatprep.subr.mxu0 %v101
    %1549 = vmatpush1.msra.mxu0 %v100
    %1550 = vmatprep.subr.mxu0 %v104
    %1551 = vmatpush1.msra.mxu0 %v103
    %1552 = vmatprep.subr.mxu0 %v107
    %1553 = vmatpush1.msra.mxu0 %v106
    %1554 = vmatprep.subr.mxu0 %v110
    %1555 = vmatpush1.msra.mxu0 %v109
    %1556 = vmatprep.subr.mxu0 0.0
    %1557 = vmatpush1.msra.mxu0 0.0
    %1558 = vmatprep.subr.mxu0 0.0
    %1559 = vmatpush1.msra.mxu0 0.0
    %1560 = vmatprep.subr.mxu0 0.0
    %1561 = vmatpush1.msra.mxu0 0.0
    %1562 = vmatprep.subr.mxu0 0.0
    %1563 = vmatpush1.msra.mxu0 0.0
    %1564 = vmatprep.subr.mxu0 0.0
    %1565 = vmatpush1.msra.mxu0 0.0
    %1566 = vmatprep.subr.mxu0 0.0
    %1567 = vmatpush1.msra.mxu0 0.0
    %1568 = vmatprep.subr.mxu0 0.0
    %1569 = vmatpush1.msra.mxu0 0.0
    %1570 = vmatprep.subr.mxu0 0.0
    %1571 = vmatpush1.msra.mxu0 0.0
    %1572 = vmatprep.subr.mxu0 0.0
    %1573 = vmatpush1.msra.mxu0 0.0
    %1574 = vmatprep.subr.mxu0 0.0
    %1575 = vmatpush1.msra.mxu0 0.0
    %1576 = vmatprep.subr.mxu0 0.0
    %1577 = vmatpush1.msra.mxu0 0.0
    %1578 = vmatprep.subr.mxu0 0.0
    %1579 = vmatpush1.msra.mxu0 0.0
    %1580 = vmatprep.subr.mxu0 0.0
    %1581 = vmatpush1.msra.mxu0 0.0
    %1582 = vmatprep.subr.mxu0 0.0
    %1583 = vmatpush1.msra.mxu0 0.0
    %1584 = vmatprep.subr.mxu0 0.0
    %1585 = vmatpush1.msra.mxu0 0.0
    %1586 = vmatprep.subr.mxu0 0.0
    %1587 = vmatpush1.msra.mxu0 0.0
    %1588 = vmatprep.mubr.f32.mxu0 0.0
    %1589 = vmatmul.mubr.f32.gmra.mrb[0].mxu0 %v1522
    %v1590 = vpop.f32.mrb[0].mxu0
    %v1591 = vadd.f32 0.0, %v1590
    %v1592 = vpop.f32.mrb[0].mxu0
    %v1593 = vadd.f32 0.0, %v1592
    %1594 = vdwg.mxu0
    %1595 = vmatprep.subr.mxu0 0.0
    %1596 = vmatpush1.msra.mxu0 %v66
    %1597 = vmatprep.subr.mxu0 0.0
    %1598 = vmatpush1.msra.mxu0 %v69
    %1599 = vmatprep.subr.mxu0 0.0
    %1600 = vmatpush1.msra.mxu0 %v72
    %1601 = vmatprep.subr.mxu0 0.0
    %1602 = vmatpush1.msra.mxu0 %v75
    %1603 = vmatprep.subr.mxu0 0.0
    %1604 = vmatpush1.msra.mxu0 %v78
    %1605 = vmatprep.subr.mxu0 0.0
    %1606 = vmatpush1.msra.mxu0 %v81
    %1607 = vmatprep.subr.mxu0 0.0
    %1608 = vmatpush1.msra.mxu0 %v84
    %1609 = vmatprep.subr.mxu0 0.0
    %1610 = vmatpush1.msra.mxu0 %v87
    %1611 = vmatprep.subr.mxu0 0.0
    %1612 = vmatpush1.msra.mxu0 %v90
    %1613 = vmatprep.subr.mxu0 0.0
    %1614 = vmatpush1.msra.mxu0 %v93
    %1615 = vmatprep.subr.mxu0 0.0
    %1616 = vmatpush1.msra.mxu0 %v96
    %1617 = vmatprep.subr.mxu0 0.0
    %1618 = vmatpush1.msra.mxu0 %v99
    %1619 = vmatprep.subr.mxu0 0.0
    %1620 = vmatpush1.msra.mxu0 %v102
    %1621 = vmatprep.subr.mxu0 0.0
    %1622 = vmatpush1.msra.mxu0 %v105
    %1623 = vmatprep.subr.mxu0 0.0
    %1624 = vmatpush1.msra.mxu0 %v108
    %1625 = vmatprep.subr.mxu0 0.0
    %1626 = vmatpush1.msra.mxu0 %v111
    %1627 = vmatprep.subr.mxu0 0.0
    %1628 = vmatpush1.msra.mxu0 0.0
    %1629 = vmatprep.subr.mxu0 0.0
    %1630 = vmatpush1.msra.mxu0 0.0
    %1631 = vmatprep.subr.mxu0 0.0
    %1632 = vmatpush1.msra.mxu0 0.0
    %1633 = vmatprep.subr.mxu0 0.0
    %1634 = vmatpush1.msra.mxu0 0.0
    %1635 = vmatprep.subr.mxu0 0.0
    %1636 = vmatpush1.msra.mxu0 0.0
    %1637 = vmatprep.subr.mxu0 0.0
    %1638 = vmatpush1.msra.mxu0 0.0
    %1639 = vmatprep.subr.mxu0 0.0
    %1640 = vmatpush1.msra.mxu0 0.0
    %1641 = vmatprep.subr.mxu0 0.0
    %1642 = vmatpush1.msra.mxu0 0.0
    %1643 = vmatprep.subr.mxu0 0.0
    %1644 = vmatpush1.msra.mxu0 0.0
    %1645 = vmatprep.subr.mxu0 0.0
    %1646 = vmatpush1.msra.mxu0 0.0
    %1647 = vmatprep.subr.mxu0 0.0
    %1648 = vmatpush1.msra.mxu0 0.0
    %1649 = vmatprep.subr.mxu0 0.0
    %1650 = vmatpush1.msra.mxu0 0.0
    %1651 = vmatprep.subr.mxu0 0.0
    %1652 = vmatpush1.msra.mxu0 0.0
    %1653 = vmatprep.subr.mxu0 0.0
    %1654 = vmatpush1.msra.mxu0 0.0
    %1655 = vmatprep.subr.mxu0 0.0
    %1656 = vmatpush1.msra.mxu0 0.0
    %1657 = vmatprep.subr.mxu0 0.0
    %1658 = vmatpush1.msra.mxu0 0.0
    %1659 = vmatprep.mubr.f32.mxu0 0.0
    %1660 = vmatmul.mubr.f32.gmra.mrb[0].mxu0 %v1522
    %v1661 = vpop.f32.mrb[0].mxu0
    %v1662 = vadd.f32 0.0, %v1661
    %v1663 = vpop.f32.mrb[0].mxu0
    %1664 = vdwg.mxu0
    %v1666 = vrot.slane %v1591, 2
    %v1668 = vadd.f32 %v221, %v1666
    %v1669 = vxor.u32 %v1668, 2147483648
    %v1670 = vmul.f32 %v1669, 1.442695
    %v1671 = vpow.pop %v1670
    %v1672 = vadd.f32 %v1671, 1.0
    %v1673 = vrcp.pop %v1672
    %v1674 = vmul.f32 1.0, %v1673
    %v1676 = vrot.slane %v1593, 2
    %v1678 = vadd.f32 %v223, %v1676
    %v1679 = vxor.u32 %v1678, 2147483648
    %v1680 = vmul.f32 %v1679, 1.442695
    %v1681 = vpow.pop %v1680
    %v1682 = vadd.f32 %v1681, 1.0
    %v1683 = vrcp.pop %v1682
    %v1684 = vmul.f32 1.0, %v1683
    %v1685 = vadd.f32 %v1662, %v303
    %v1687 = vrot.slane %v1685, 2
    %v1689 = vmul.f32 %v1674, %v1687
    %v1690 = vadd.f32 %v297, %v1689
    %v1691 = vtanh.pop %v1690
    %v1692 = vsub.f32 1.0, %v1684
    %v1693 = vmul.f32 %v1692, %v1691
    %v1694 = vrot.slane %v1519, 6
    %v1696 = vmul.f32 %v1684, %v1694
    %v1697 = vadd.f32 %v1693, %v1696
    %1698 = vst [vmem:[#allocation2 + $0x8] sm:$0xc0] %v1697
    %v1699 = vld [vmem:[#allocation6] sm:$0xff]
    %v1700 = vld [vmem:[#allocation6 + $0x8] sm:$0xff]
    %v1701 = vld [vmem:[#allocation6 + $0x10] sm:$0xff]
    %v1702 = vld [vmem:[#allocation6 + $0x18] sm:$0xff]
    %v1703 = vld [vmem:[#allocation6 + $0x20] sm:$0xff]
    %v1704 = vld [vmem:[#allocation6 + $0x28] sm:$0xff]
    %v1705 = vld [vmem:[#allocation6 + $0x30] sm:$0xff]
    %v1706 = vld [vmem:[#allocation6 + $0x38] sm:$0xff]
    %v1707 = vld [vmem:[#allocation6 + $0x40] sm:$0xff]
    %v1708 = vld [vmem:[#allocation6 + $0x48] sm:$0xff]
    %v1709 = vld [vmem:[#allocation6 + $0x50] sm:$0xff]
    %v1710 = vld [vmem:[#allocation6 + $0x58] sm:$0xff]
    %v1711 = vld [vmem:[#allocation6 + $0x60] sm:$0xff]
    %v1712 = vld [vmem:[#allocation6 + $0x68] sm:$0xff]
    %v1713 = vld [vmem:[#allocation6 + $0x70] sm:$0xff]
    %v1714 = vld [vmem:[#allocation6 + $0x78] sm:$0xff]
    %v1715 = vld [vmem:[#allocation6 + $0x80] sm:$0x1]
    %v1716 = vld [vmem:[#allocation2] sm:$0xff]
    %v1717 = vld [vmem:[#allocation2 + $0x8] sm:$0xff]
    %v1718 = vlaneseq
    %v1719 = vshrl.u32 %v1718, 7
    %v1720 = vsub.s32 0, %v1719
    %v1721 = vrot.slane %v1715, %v1720
    %1722 = vmatprep.subr.mxu0 0.0
    %1723 = vmatpush1.msra.mxu0 %v1699
    %1724 = vmatprep.subr.mxu0 0.0
    %1725 = vmatpush1.msra.mxu0 %v1700
    %1726 = vmatprep.subr.mxu0 0.0
    %1727 = vmatpush1.msra.mxu0 %v1701
    %1728 = vmatprep.subr.mxu0 0.0
    %1729 = vmatpush1.msra.mxu0 %v1702
    %1730 = vmatprep.subr.mxu0 0.0
    %1731 = vmatpush1.msra.mxu0 %v1703
    %1732 = vmatprep.subr.mxu0 0.0
    %1733 = vmatpush1.msra.mxu0 %v1704
    %1734 = vmatprep.subr.mxu0 0.0
    %1735 = vmatpush1.msra.mxu0 %v1705
    %1736 = vmatprep.subr.mxu0 0.0
    %1737 = vmatpush1.msra.mxu0 %v1706
    %1738 = vmatprep.subr.mxu0 0.0
    %1739 = vmatpush1.msra.mxu0 %v1707
    %1740 = vmatprep.subr.mxu0 0.0
    %1741 = vmatpush1.msra.mxu0 %v1708
    %1742 = vmatprep.subr.mxu0 0.0
    %1743 = vmatpush1.msra.mxu0 %v1709
    %1744 = vmatprep.subr.mxu0 0.0
    %1745 = vmatpush1.msra.mxu0 %v1710
    %1746 = vmatprep.subr.mxu0 0.0
    %1747 = vmatpush1.msra.mxu0 %v1711
    %1748 = vmatprep.subr.mxu0 0.0
    %1749 = vmatpush1.msra.mxu0 %v1712
    %1750 = vmatprep.subr.mxu0 0.0
    %1751 = vmatpush1.msra.mxu0 %v1713
    %1752 = vmatprep.subr.mxu0 0.0
    %1753 = vmatpush1.msra.mxu0 %v1714
    %1754 = vmatprep.subr.mxu0 0.0
    %1755 = vmatpush1.msra.mxu0 0.0
    %1756 = vmatprep.subr.mxu0 0.0
    %1757 = vmatpush1.msra.mxu0 0.0
    %1758 = vmatprep.subr.mxu0 0.0
    %1759 = vmatpush1.msra.mxu0 0.0
    %1760 = vmatprep.subr.mxu0 0.0
    %1761 = vmatpush1.msra.mxu0 0.0
    %1762 = vmatprep.subr.mxu0 0.0
    %1763 = vmatpush1.msra.mxu0 0.0
    %1764 = vmatprep.subr.mxu0 0.0
    %1765 = vmatpush1.msra.mxu0 0.0
    %1766 = vmatprep.subr.mxu0 0.0
    %1767 = vmatpush1.msra.mxu0 0.0
    %1768 = vmatprep.subr.mxu0 0.0
    %1769 = vmatpush1.msra.mxu0 0.0
    %1770 = vmatprep.subr.mxu0 0.0
    %1771 = vmatpush1.msra.mxu0 0.0
    %1772 = vmatprep.subr.mxu0 0.0
    %1773 = vmatpush1.msra.mxu0 0.0
    %1774 = vmatprep.subr.mxu0 0.0
    %1775 = vmatpush1.msra.mxu0 0.0
    %1776 = vmatprep.subr.mxu0 0.0
    %1777 = vmatpush1.msra.mxu0 0.0
    %1778 = vmatprep.subr.mxu0 0.0
    %1779 = vmatpush1.msra.mxu0 0.0
    %1780 = vmatprep.subr.mxu0 0.0
    %1781 = vmatpush1.msra.mxu0 0.0
    %1782 = vmatprep.subr.mxu0 0.0
    %1783 = vmatpush1.msra.mxu0 0.0
    %1784 = vmatprep.subr.mxu0 0.0
    %1785 = vmatpush1.msra.mxu0 0.0
    %1786 = vmatprep.mubr.f32.mxu0 0.0
    %1787 = vmatmul.mubr.f32.gmra.mrb[0].mxu0 %v1716
    %v1788 = vpop.f32.mrb[0].mxu0
    %v1789 = vadd.f32 %v1721, %v1788
    %v1790 = vpop.f32.mrb[0].mxu0
    %1791 = vmatprep.mubr.f32.mxu0 0.0
    %1792 = vmatmul.mubr.f32.gmra.mrb[0].mxu0 %v1717
    %v1793 = vpop.f32.mrb[0].mxu0
    %v1794 = vadd.f32 %v1721, %v1793
    %v1795 = vpop.f32.mrb[0].mxu0
    %1796 = vdwg.mxu0
    %1797 = vst [vmem:[#allocation8] sm:$0xff] %v1789
    %1798 = vst [vmem:[#allocation8 + $0x8] sm:$0xff] %v1794
    // Predicated region
    $region22: #{tpu_custom_call.1} parent=1 // pred_check
      _
    $region23: #{tpu_custom_call.1} parent=1 // pred_check_branch
      %1800 = sbr.rel (0) target = $region25
    $region24: #{tpu_custom_call.1} parent=1 // pred_region
      %s1802 = ssub.s32 256, 256
      %1803 = vsyncadd [#allocation5], %s1802
      %s1804 = sshll.u32 [#allocation8], 4
      %s1805 = int_to_ptr.vmem [resolvable:$true] %s1804
      %1810 = dma.vmem_to_hbm [thread:$0]  %s1805, 256, %s3, [#allocation5], 128, 128, 8
    $region25: #{tpu_custom_call.1} parent=1 // pred_fallthru
      _
    // Predicated region
    $region26: #{tpu_custom_call.1} parent=1 // pred_check
      _
    $region27: #{tpu_custom_call.1} parent=1 // pred_check_branch
      %1812 = sbr.rel (0) target = $region29
    $region28: #{tpu_custom_call.1} parent=1 // pred_region
      %1813 = dma.done [#allocation5], 256
    $region29: #{tpu_custom_call.1} parent=1 // pred_fallthru
      _
    %1814 = vsyncpa [#allocation4], 1
    %1815 = vsyncpa [#allocation7], 1
    %1816 = vsyncpa [#allocation5], 1

</llo_original>
